<compile_context>
chip_gen: v7x
topology: tpu7x:2x2x1
jax: 0.10.0
libtpu: 0.0.40
codegen_flags: <defaults>
</compile_context>

<pallas_src>
import functools

import jax
import jax.numpy as jnp
from jax.experimental import pallas as pl
from jax.experimental.pallas import tpu as pltpu


def downsample_conv_kernel(x_ref, w_ref, o_ref, *, bt, ho, wo, c_in, c_out):
    """One grid step: im2col + one MXU matmul for a tile of `bt` batch elements.

    x_ref: (4, bt, Ho+1, Wo+1, c_in)  f32   stride-2 phases of the zero-padded input,
                                            phase index p = 2*(kh%2) + (kw%2)
    w_ref: (9*c_in, c_out)            bf16  conv weight, rows ordered (kh, kw, ci)
    o_ref: (bt, ho, wo, c_out)        f32   NHWC output tile
    """
    m = bt * ho * wo
    taps = []
    for kh in range(3):                      # static unroll: 9 taps of the 3x3 window
        for kw in range(3):
            p = 2 * (kh % 2) + (kw % 2)      # which stride-2 phase holds this tap
            dh, dw = kh // 2, kw // 2        # shift inside the phase (unit-stride slice)
            tap = x_ref[p, :, pl.ds(dh, ho), pl.ds(dw, wo), :]   # (bt, ho, wo, c_in)
            taps.append(tap.reshape(m, c_in).astype(jnp.bfloat16))
    # im2col: lane-aligned concat (each piece is a full 128-lane tile) -> (m, 9*c_in)
    patches = jnp.concatenate(taps, axis=-1)
    # single full-K bf16 matmul on the MXU, f32 accumulation
    acc = jnp.dot(patches, w_ref[...], preferred_element_type=jnp.float32)  # (m, c_out)
    o_ref[...] = acc.reshape(bt, ho, wo, c_out).astype(o_ref.dtype)


def downsample(x_nchw, w_oihw, *, batch_tile=None):
    """Forward pass of Downsample: y = Conv2d(C_in, C_out, 3, stride=2, pad=1, bias=False)(x)."""
    B, C_in, H, W = x_nchw.shape
    C_out, C_in_w, KH, KW = w_oihw.shape
    assert (KH, KW) == (3, 3) and C_in_w == C_in
    assert H % 2 == 0 and W % 2 == 0, "stride-2 downsample expects even spatial dims"
    Ho, Wo = H // 2, W // 2

    # ---- host-side layout plumbing (no compute) ----
    x_nhwc = jnp.transpose(x_nchw, (0, 2, 3, 1))                    # (B, H, W, C)
    x_pad = jnp.pad(x_nhwc, ((0, 0), (1, 1), (1, 1), (0, 0)))       # (B, H+2, W+2, C)
    # stride-2 phase split (space-to-depth): phases[2*ph+pw] = x_pad[:, ph::2, pw::2, :]
    phases = jnp.stack(
        [x_pad[:, ph::2, pw::2, :] for ph in (0, 1) for pw in (0, 1)],
        axis=0)                                                     # (4, B, Ho+1, Wo+1, C)
    # weight (Cout, Cin, 3, 3) -> (3, 3, Cin, Cout) -> (9*Cin, Cout); bf16 MXU operand
    w_mat = jnp.transpose(w_oihw, (2, 3, 1, 0)).reshape(9 * C_in, C_out).astype(jnp.bfloat16)

    # batch tile: fill the MXU M dimension (>= 128 rows per step) while dividing B
    if batch_tile is None:
        batch_tile = min(B, max(1, -(-128 // (Ho * Wo))))
        while B % batch_tile:
            batch_tile -= 1
    bt = batch_tile
    assert B % bt == 0
    grid = (B // bt,)

    kernel = functools.partial(downsample_conv_kernel,
                               bt=bt, ho=Ho, wo=Wo, c_in=C_in, c_out=C_out)
    out_nhwc = pl.pallas_call(
        kernel,
        out_shape=jax.ShapeDtypeStruct((B, Ho, Wo, C_out), jnp.float32),
        grid=grid,
        in_specs=[
            pl.BlockSpec((4, bt, Ho + 1, Wo + 1, C_in), lambda b: (0, b, 0, 0, 0)),
            pl.BlockSpec((9 * C_in, C_out), lambda b: (0, 0)),
        ],
        out_specs=pl.BlockSpec((bt, Ho, Wo, C_out), lambda b: (b, 0, 0, 0)),
        compiler_params=pltpu.CompilerParams(dimension_semantics=("parallel",)),
    )(phases, w_mat)

    return jnp.transpose(out_nhwc, (0, 3, 1, 2))                    # back to NCHW


if __name__ == "__main__":
    DIM = 128                      # module: dim = 128
    B, H, W = 2, 16, 16
    C_OUT = 2 * DIM                # keep_dim=False (default) -> dim_out = 2*dim

    key = jax.random.PRNGKey(0)
    kx, kw = jax.random.split(key)
    x = jax.random.normal(kx, (B, DIM, H, W), dtype=jnp.float32)
    w = ((9 * DIM) ** -0.5) * jax.random.normal(kw, (C_OUT, DIM, 3, 3), dtype=jnp.float32)

    out = downsample(x, w)
    out = jax.block_until_ready(out)
    assert out.shape == (B, C_OUT, H // 2, W // 2), out.shape

    # Reference: XLA conv with identical bf16 operand rounding and f32 accumulation.
    ref = jax.lax.conv_general_dilated(
        x.astype(jnp.bfloat16), w.astype(jnp.bfloat16),
        window_strides=(2, 2), padding=((1, 1), (1, 1)),
        dimension_numbers=("NCHW", "OIHW", "NCHW"),
        preferred_element_type=jnp.float32)
    max_err = jnp.max(jnp.abs(out - ref))
    assert jnp.allclose(out, ref, rtol=1e-2, atol=1e-2), f"max err {max_err}"

    print("KERNEL_OK")
</pallas_src>

<mosaic_0001>
module attributes {stable_mosaic.version = 11 : i64} {
  func.func @downsample_conv_kernel(%arg0: i32, %arg1: memref<4x2x9x9x128xf32, #tpu.memory_space<vmem>>, %arg2: memref<1152x256xbf16, #tpu.memory_space<vmem>>, %arg3: memref<2x8x8x256xf32, #tpu.memory_space<vmem>>) attributes {dimension_semantics = [#tpu.dimension_semantics<parallel>], iteration_bounds = array<i64: 1>, scalar_prefetch = 0 : i64, scratch_operands = 0 : i64, tpu.core_type = #tpu.core_type<tc>, window_params = [{transform_indices = @transform_0, window_bounds = array<i64: 4, 2, 9, 9, 128>}, {pipeline_mode = #tpu.pipeline_mode<synchronous>, transform_indices = @transform_1, window_bounds = array<i64: 1152, 256>}, {transform_indices = @transform_2, window_bounds = array<i64: 2, 8, 8, 256>}]} {
    %c0 = arith.constant 0 : index
    %c0_0 = arith.constant 0 : index
    %c0_1 = arith.constant 0 : index
    %c0_2 = arith.constant 0 : index
    %c0_3 = arith.constant 0 : index
    %0 = vector.load %arg1[%c0, %c0_0, %c0_1, %c0_2, %c0_3] : memref<4x2x9x9x128xf32, #tpu.memory_space<vmem>>, vector<1x2x8x8x128xf32>
    %1 = vector.shape_cast %0 : vector<1x2x8x8x128xf32> to vector<2x8x8x128xf32>
    %2 = vector.shape_cast %1 : vector<2x8x8x128xf32> to vector<128x128xf32>
    %3 = arith.truncf %2 : vector<128x128xf32> to vector<128x128xbf16>
    %c1 = arith.constant 1 : index
    %c0_4 = arith.constant 0 : index
    %c0_5 = arith.constant 0 : index
    %c0_6 = arith.constant 0 : index
    %c0_7 = arith.constant 0 : index
    %4 = vector.load %arg1[%c1, %c0_4, %c0_5, %c0_6, %c0_7] : memref<4x2x9x9x128xf32, #tpu.memory_space<vmem>>, vector<1x2x8x8x128xf32>
    %5 = vector.shape_cast %4 : vector<1x2x8x8x128xf32> to vector<2x8x8x128xf32>
    %6 = vector.shape_cast %5 : vector<2x8x8x128xf32> to vector<128x128xf32>
    %7 = arith.truncf %6 : vector<128x128xf32> to vector<128x128xbf16>
    %c0_8 = arith.constant 0 : index
    %c0_9 = arith.constant 0 : index
    %c0_10 = arith.constant 0 : index
    %c1_11 = arith.constant 1 : index
    %c0_12 = arith.constant 0 : index
    %8 = vector.load %arg1[%c0_8, %c0_9, %c0_10, %c1_11, %c0_12] : memref<4x2x9x9x128xf32, #tpu.memory_space<vmem>>, vector<1x2x8x8x128xf32>
    %9 = vector.shape_cast %8 : vector<1x2x8x8x128xf32> to vector<2x8x8x128xf32>
    %10 = vector.shape_cast %9 : vector<2x8x8x128xf32> to vector<128x128xf32>
    %11 = arith.truncf %10 : vector<128x128xf32> to vector<128x128xbf16>
    %c2 = arith.constant 2 : index
    %c0_13 = arith.constant 0 : index
    %c0_14 = arith.constant 0 : index
    %c0_15 = arith.constant 0 : index
    %c0_16 = arith.constant 0 : index
    %12 = vector.load %arg1[%c2, %c0_13, %c0_14, %c0_15, %c0_16] : memref<4x2x9x9x128xf32, #tpu.memory_space<vmem>>, vector<1x2x8x8x128xf32>
    %13 = vector.shape_cast %12 : vector<1x2x8x8x128xf32> to vector<2x8x8x128xf32>
    %14 = vector.shape_cast %13 : vector<2x8x8x128xf32> to vector<128x128xf32>
    %15 = arith.truncf %14 : vector<128x128xf32> to vector<128x128xbf16>
    %c3 = arith.constant 3 : index
    %c0_17 = arith.constant 0 : index
    %c0_18 = arith.constant 0 : index
    %c0_19 = arith.constant 0 : index
    %c0_20 = arith.constant 0 : index
    %16 = vector.load %arg1[%c3, %c0_17, %c0_18, %c0_19, %c0_20] : memref<4x2x9x9x128xf32, #tpu.memory_space<vmem>>, vector<1x2x8x8x128xf32>
    %17 = vector.shape_cast %16 : vector<1x2x8x8x128xf32> to vector<2x8x8x128xf32>
    %18 = vector.shape_cast %17 : vector<2x8x8x128xf32> to vector<128x128xf32>
    %19 = arith.truncf %18 : vector<128x128xf32> to vector<128x128xbf16>
    %c2_21 = arith.constant 2 : index
    %c0_22 = arith.constant 0 : index
    %c0_23 = arith.constant 0 : index
    %c1_24 = arith.constant 1 : index
    %c0_25 = arith.constant 0 : index
    %20 = vector.load %arg1[%c2_21, %c0_22, %c0_23, %c1_24, %c0_25] : memref<4x2x9x9x128xf32, #tpu.memory_space<vmem>>, vector<1x2x8x8x128xf32>
    %21 = vector.shape_cast %20 : vector<1x2x8x8x128xf32> to vector<2x8x8x128xf32>
    %22 = vector.shape_cast %21 : vector<2x8x8x128xf32> to vector<128x128xf32>
    %23 = arith.truncf %22 : vector<128x128xf32> to vector<128x128xbf16>
    %c0_26 = arith.constant 0 : index
    %c0_27 = arith.constant 0 : index
    %c1_28 = arith.constant 1 : index
    %c0_29 = arith.constant 0 : index
    %c0_30 = arith.constant 0 : index
    %24 = vector.load %arg1[%c0_26, %c0_27, %c1_28, %c0_29, %c0_30] : memref<4x2x9x9x128xf32, #tpu.memory_space<vmem>>, vector<1x2x8x8x128xf32>
    %25 = vector.shape_cast %24 : vector<1x2x8x8x128xf32> to vector<2x8x8x128xf32>
    %26 = vector.shape_cast %25 : vector<2x8x8x128xf32> to vector<128x128xf32>
    %27 = arith.truncf %26 : vector<128x128xf32> to vector<128x128xbf16>
    %c1_31 = arith.constant 1 : index
    %c0_32 = arith.constant 0 : index
    %c1_33 = arith.constant 1 : index
    %c0_34 = arith.constant 0 : index
    %c0_35 = arith.constant 0 : index
    %28 = vector.load %arg1[%c1_31, %c0_32, %c1_33, %c0_34, %c0_35] : memref<4x2x9x9x128xf32, #tpu.memory_space<vmem>>, vector<1x2x8x8x128xf32>
    %29 = vector.shape_cast %28 : vector<1x2x8x8x128xf32> to vector<2x8x8x128xf32>
    %30 = vector.shape_cast %29 : vector<2x8x8x128xf32> to vector<128x128xf32>
    %31 = arith.truncf %30 : vector<128x128xf32> to vector<128x128xbf16>
    %c0_36 = arith.constant 0 : index
    %c0_37 = arith.constant 0 : index
    %c1_38 = arith.constant 1 : index
    %c1_39 = arith.constant 1 : index
    %c0_40 = arith.constant 0 : index
    %32 = vector.load %arg1[%c0_36, %c0_37, %c1_38, %c1_39, %c0_40] : memref<4x2x9x9x128xf32, #tpu.memory_space<vmem>>, vector<1x2x8x8x128xf32>
    %33 = vector.shape_cast %32 : vector<1x2x8x8x128xf32> to vector<2x8x8x128xf32>
    %34 = vector.shape_cast %33 : vector<2x8x8x128xf32> to vector<128x128xf32>
    %35 = arith.truncf %34 : vector<128x128xf32> to vector<128x128xbf16>
    %36 = tpu.concatenate %3, %7, %11, %15, %19, %23, %27, %31, %35 in 1 : vector<128x128xbf16>, vector<128x128xbf16>, vector<128x128xbf16>, vector<128x128xbf16>, vector<128x128xbf16>, vector<128x128xbf16>, vector<128x128xbf16>, vector<128x128xbf16>, vector<128x128xbf16> -> vector<128x1152xbf16>
    %c0_41 = arith.constant 0 : index
    %c0_42 = arith.constant 0 : index
    %37 = vector.load %arg2[%c0_41, %c0_42] : memref<1152x256xbf16, #tpu.memory_space<vmem>>, vector<1152x256xbf16>
    %cst = arith.constant dense<0.000000e+00> : vector<128x256xf32>
    %38 = tpu.matmul %36, %37, %cst {dimension_numbers = #tpu.dot_dimension_numbers<[1], [0], [0], [1], [0, 0, 1, 1], [], []>} : vector<128x1152xbf16>, vector<1152x256xbf16>, vector<128x256xf32> -> vector<128x256xf32>
    %39 = vector.shape_cast %38 : vector<128x256xf32> to vector<2x8x8x256xf32>
    %c0_43 = arith.constant 0 : index
    %c0_44 = arith.constant 0 : index
    %c0_45 = arith.constant 0 : index
    %c0_46 = arith.constant 0 : index
    %40 = vector.load %arg3[%c0_43, %c0_44, %c0_45, %c0_46] : memref<2x8x8x256xf32, #tpu.memory_space<vmem>>, vector<2x8x8x256xf32>
    tpu.vector_store %arg3[%c0_43, %c0_44, %c0_45, %c0_46], %39 {strides = array<i32>} : memref<2x8x8x256xf32, #tpu.memory_space<vmem>>, vector<2x8x8x256xf32>,
    return
  }
  func.func @transform_0(%arg0: i32) -> (i32, i32, i32, i32, i32) {
    %c0_i32 = arith.constant 0 : i32
    %c0_i32_0 = arith.constant 0 : i32
    %c0_i32_1 = arith.constant 0 : i32
    %c0_i32_2 = arith.constant 0 : i32
    %c0_i32_3 = arith.constant 0 : i32
    return %c0_i32, %arg0, %c0_i32_0, %c0_i32_1, %c0_i32_2 : i32, i32, i32, i32, i32
  }
  func.func @transform_1(%arg0: i32) -> (i32, i32) {
    %c0_i32 = arith.constant 0 : i32
    %c0_i32_0 = arith.constant 0 : i32
    %c0_i32_1 = arith.constant 0 : i32
    return %c0_i32, %c0_i32_0 : i32, i32
  }
  func.func @transform_2(%arg0: i32) -> (i32, i32, i32, i32) {
    %c0_i32 = arith.constant 0 : i32
    %c0_i32_0 = arith.constant 0 : i32
    %c0_i32_1 = arith.constant 0 : i32
    %c0_i32_2 = arith.constant 0 : i32
    return %arg0, %c0_i32, %c0_i32_0, %c0_i32_1 : i32, i32, i32, i32
  }
}

</mosaic_0001>

<llo_original>
// kernel: tpu_custom_call.1
$region0: #{tpu_custom_call.1}
  #allocation0 [shape = 'u32[]', space=smem, size = 0x4, offset = 0x4, fixed_abs, tag = 'smem constant byte address 0x4 - core index']
  #allocation1 [shape = 'u32[144,128]{1,0:T(1,128)}', space=vmem, size = 0x12000, scoped, tag = 'internal scratch']
  %s0 = inlined_call_operand.vmem [shape: f32[4,2,9,9,128], index: 0, kind: input, shape index: {}]
  %s1 = inlined_call_operand.vmem [shape: bf16[1152,256], index: 1, kind: input, shape index: {}]
  %s2 = inlined_call_operand.hbm [shape: f32[2,8,8,256], index: 2, kind: output, shape index: {}]
  %s3 = sld [smem:[#allocation0]]
  $region18: #{tpu_custom_call.1} parent=0
    _
  %s5 = ssub.s32 1, %s3
  %s6 = scalar_select 0, %s5, %s3
  $region1: #{tpu_custom_call.1} parent=0
    #allocation2 [shape = 'u8[131072]{0}', space=vmem, size = 0x20000, scoped, tag = 'output window, operand 0, single buffered']
    #allocation3 [shape = 's32[1]{0}', space=sflag, size = 0x4, scoped, tag = 'scoped memory for tpu_custom_call.1']
    %7 = vsyncpa [#allocation3], 0
    // Predicated region
    $region2: #{tpu_custom_call.1} parent=1 // pred_check
      _
    $region3: #{tpu_custom_call.1} parent=1 // pred_check_branch
      %9 = sbr.rel (0) target = $region5
    $region4: #{tpu_custom_call.1} parent=1 // pred_region
      _
    $region5: #{tpu_custom_call.1} parent=1 // pred_fallthru
      _
    // Predicated region
    $region6: #{tpu_custom_call.1} parent=1 // pred_check
      _
    $region7: #{tpu_custom_call.1} parent=1 // pred_check_branch
      %11 = sbr.rel (0) target = $region9
    $region8: #{tpu_custom_call.1} parent=1 // pred_region
      _
    $region9: #{tpu_custom_call.1} parent=1 // pred_fallthru
      _
    %v13 = vld [vmem:[%s0] sm:$0xff]
    %v14 = vld [vmem:[%s0 + $0x10] sm:$0xff]
    %v15 = vld [vmem:[%s0 + $0x20] sm:$0xff]
    %v16 = vld [vmem:[%s0 + $0x30] sm:$0xff]
    %v17 = vld [vmem:[%s0 + $0x40] sm:$0xff]
    %v18 = vld [vmem:[%s0 + $0x50] sm:$0xff]
    %v19 = vld [vmem:[%s0 + $0x60] sm:$0xff]
    %v20 = vld [vmem:[%s0 + $0x70] sm:$0xff]
    %v21 = vld [vmem:[%s0 + $0x90] sm:$0xff]
    %v22 = vld [vmem:[%s0 + $0xa0] sm:$0xff]
    %v23 = vld [vmem:[%s0 + $0xb0] sm:$0xff]
    %v24 = vld [vmem:[%s0 + $0xc0] sm:$0xff]
    %v25 = vld [vmem:[%s0 + $0xd0] sm:$0xff]
    %v26 = vld [vmem:[%s0 + $0xe0] sm:$0xff]
    %v27 = vld [vmem:[%s0 + $0xf0] sm:$0xff]
    %v28 = vld [vmem:[%s0 + $0x100] sm:$0xff]
    %v29 = vpack.c.bf16 %v14, %v13
    %v30 = vpack.c.bf16 %v16, %v15
    %v31 = vpack.c.bf16 %v18, %v17
    %v32 = vpack.c.bf16 %v20, %v19
    %v33 = vpack.c.bf16 %v22, %v21
    %v34 = vpack.c.bf16 %v24, %v23
    %v35 = vpack.c.bf16 %v26, %v25
    %v36 = vpack.c.bf16 %v28, %v27
    %s37 = scalar_lea.vmem %s0, 288
    %v38 = vld [vmem:[%s37] sm:$0xff]
    %v39 = vld [vmem:[%s37 + $0x10] sm:$0xff]
    %v40 = vld [vmem:[%s37 + $0x20] sm:$0xff]
    %v41 = vld [vmem:[%s37 + $0x30] sm:$0xff]
    %v42 = vld [vmem:[%s37 + $0x40] sm:$0xff]
    %v43 = vld [vmem:[%s37 + $0x50] sm:$0xff]
    %v44 = vld [vmem:[%s37 + $0x60] sm:$0xff]
    %v45 = vld [vmem:[%s37 + $0x70] sm:$0xff]
    %v46 = vld [vmem:[%s37 + $0x90] sm:$0xff]
    %v47 = vld [vmem:[%s37 + $0xa0] sm:$0xff]
    %v48 = vld [vmem:[%s37 + $0xb0] sm:$0xff]
    %v49 = vld [vmem:[%s37 + $0xc0] sm:$0xff]
    %v50 = vld [vmem:[%s37 + $0xd0] sm:$0xff]
    %v51 = vld [vmem:[%s37 + $0xe0] sm:$0xff]
    %v52 = vld [vmem:[%s37 + $0xf0] sm:$0xff]
    %v53 = vld [vmem:[%s37 + $0x100] sm:$0xff]
    %v54 = vpack.c.bf16 %v39, %v38
    %v55 = vpack.c.bf16 %v41, %v40
    %v56 = vpack.c.bf16 %v43, %v42
    %v57 = vpack.c.bf16 %v45, %v44
    %v58 = vpack.c.bf16 %v47, %v46
    %v59 = vpack.c.bf16 %v49, %v48
    %v60 = vpack.c.bf16 %v51, %v50
    %v61 = vpack.c.bf16 %v53, %v52
    %v62 = vld [vmem:[%s0 + $0x1] sm:$0xff]
    %v63 = vld [vmem:[%s0 + $0x11] sm:$0xff]
    %v64 = vld [vmem:[%s0 + $0x21] sm:$0xff]
    %v65 = vld [vmem:[%s0 + $0x31] sm:$0xff]
    %v66 = vld [vmem:[%s0 + $0x41] sm:$0xff]
    %v67 = vld [vmem:[%s0 + $0x51] sm:$0xff]
    %v68 = vld [vmem:[%s0 + $0x61] sm:$0xff]
    %v69 = vld [vmem:[%s0 + $0x71] sm:$0xff]
    %v70 = vld [vmem:[%s0 + $0x91] sm:$0xff]
    %v71 = vld [vmem:[%s0 + $0xa1] sm:$0xff]
    %v72 = vld [vmem:[%s0 + $0xb1] sm:$0xff]
    %v73 = vld [vmem:[%s0 + $0xc1] sm:$0xff]
    %v74 = vld [vmem:[%s0 + $0xd1] sm:$0xff]
    %v75 = vld [vmem:[%s0 + $0xe1] sm:$0xff]
    %v76 = vld [vmem:[%s0 + $0xf1] sm:$0xff]
    %v77 = vld [vmem:[%s0 + $0x101] sm:$0xff]
    %v78 = vpack.c.bf16 %v63, %v62
    %v79 = vpack.c.bf16 %v65, %v64
    %v80 = vpack.c.bf16 %v67, %v66
    %v81 = vpack.c.bf16 %v69, %v68
    %v82 = vpack.c.bf16 %v71, %v70
    %v83 = vpack.c.bf16 %v73, %v72
    %v84 = vpack.c.bf16 %v75, %v74
    %v85 = vpack.c.bf16 %v77, %v76
    %s86 = scalar_lea.vmem %s0, 576
    %v87 = vld [vmem:[%s86] sm:$0xff]
    %v88 = vld [vmem:[%s86 + $0x10] sm:$0xff]
    %v89 = vld [vmem:[%s86 + $0x20] sm:$0xff]
    %v90 = vld [vmem:[%s86 + $0x30] sm:$0xff]
    %v91 = vld [vmem:[%s86 + $0x40] sm:$0xff]
    %v92 = vld [vmem:[%s86 + $0x50] sm:$0xff]
    %v93 = vld [vmem:[%s86 + $0x60] sm:$0xff]
    %v94 = vld [vmem:[%s86 + $0x70] sm:$0xff]
    %v95 = vld [vmem:[%s86 + $0x90] sm:$0xff]
    %v96 = vld [vmem:[%s86 + $0xa0] sm:$0xff]
    %v97 = vld [vmem:[%s86 + $0xb0] sm:$0xff]
    %v98 = vld [vmem:[%s86 + $0xc0] sm:$0xff]
    %v99 = vld [vmem:[%s86 + $0xd0] sm:$0xff]
    %v100 = vld [vmem:[%s86 + $0xe0] sm:$0xff]
    %v101 = vld [vmem:[%s86 + $0xf0] sm:$0xff]
    %v102 = vld [vmem:[%s86 + $0x100] sm:$0xff]
    %v103 = vpack.c.bf16 %v88, %v87
    %v104 = vpack.c.bf16 %v90, %v89
    %v105 = vpack.c.bf16 %v92, %v91
    %v106 = vpack.c.bf16 %v94, %v93
    %v107 = vpack.c.bf16 %v96, %v95
    %v108 = vpack.c.bf16 %v98, %v97
    %v109 = vpack.c.bf16 %v100, %v99
    %v110 = vpack.c.bf16 %v102, %v101
    %s111 = scalar_lea.vmem %s0, 864
    %v112 = vld [vmem:[%s111] sm:$0xff]
    %v113 = vld [vmem:[%s111 + $0x10] sm:$0xff]
    %v114 = vld [vmem:[%s111 + $0x20] sm:$0xff]
    %v115 = vld [vmem:[%s111 + $0x30] sm:$0xff]
    %v116 = vld [vmem:[%s111 + $0x40] sm:$0xff]
    %v117 = vld [vmem:[%s111 + $0x50] sm:$0xff]
    %v118 = vld [vmem:[%s111 + $0x60] sm:$0xff]
    %v119 = vld [vmem:[%s111 + $0x70] sm:$0xff]
    %v120 = vld [vmem:[%s111 + $0x90] sm:$0xff]
    %v121 = vld [vmem:[%s111 + $0xa0] sm:$0xff]
    %v122 = vld [vmem:[%s111 + $0xb0] sm:$0xff]
    %v123 = vld [vmem:[%s111 + $0xc0] sm:$0xff]
    %v124 = vld [vmem:[%s111 + $0xd0] sm:$0xff]
    %v125 = vld [vmem:[%s111 + $0xe0] sm:$0xff]
    %v126 = vld [vmem:[%s111 + $0xf0] sm:$0xff]
    %v127 = vld [vmem:[%s111 + $0x100] sm:$0xff]
    %v128 = vpack.c.bf16 %v113, %v112
    %v129 = vpack.c.bf16 %v115, %v114
    %v130 = vpack.c.bf16 %v117, %v116
    %v131 = vpack.c.bf16 %v119, %v118
    %v132 = vpack.c.bf16 %v121, %v120
    %v133 = vpack.c.bf16 %v123, %v122
    %v134 = vpack.c.bf16 %v125, %v124
    %v135 = vpack.c.bf16 %v127, %v126
    %v136 = vld [vmem:[%s86 + $0x1] sm:$0xff]
    %v137 = vld [vmem:[%s86 + $0x11] sm:$0xff]
    %v138 = vld [vmem:[%s86 + $0x21] sm:$0xff]
    %v139 = vld [vmem:[%s86 + $0x31] sm:$0xff]
    %v140 = vld [vmem:[%s86 + $0x41] sm:$0xff]
    %v141 = vld [vmem:[%s86 + $0x51] sm:$0xff]
    %v142 = vld [vmem:[%s86 + $0x61] sm:$0xff]
    %v143 = vld [vmem:[%s86 + $0x71] sm:$0xff]
    %v144 = vld [vmem:[%s86 + $0x91] sm:$0xff]
    %v145 = vld [vmem:[%s86 + $0xa1] sm:$0xff]
    %v146 = vld [vmem:[%s86 + $0xb1] sm:$0xff]
    %v147 = vld [vmem:[%s86 + $0xc1] sm:$0xff]
    %v148 = vld [vmem:[%s86 + $0xd1] sm:$0xff]
    %v149 = vld [vmem:[%s86 + $0xe1] sm:$0xff]
    %v150 = vld [vmem:[%s86 + $0xf1] sm:$0xff]
    %v151 = vld [vmem:[%s86 + $0x101] sm:$0xff]
    %v152 = vpack.c.bf16 %v137, %v136
    %v153 = vpack.c.bf16 %v139, %v138
    %v154 = vpack.c.bf16 %v141, %v140
    %v155 = vpack.c.bf16 %v143, %v142
    %v156 = vpack.c.bf16 %v145, %v144
    %v157 = vpack.c.bf16 %v147, %v146
    %v158 = vpack.c.bf16 %v149, %v148
    %v159 = vpack.c.bf16 %v151, %v150
    %s160 = scalar_lea.vmem %s0, 16
    %v161 = vld [vmem:[%s160] sm:$0xff]
    %v162 = vld [vmem:[%s160 + $0x10] sm:$0xff]
    %v163 = vld [vmem:[%s160 + $0x20] sm:$0xff]
    %v164 = vld [vmem:[%s160 + $0x30] sm:$0xff]
    %v165 = vld [vmem:[%s160 + $0x40] sm:$0xff]
    %v166 = vld [vmem:[%s160 + $0x50] sm:$0xff]
    %v167 = vld [vmem:[%s160 + $0x60] sm:$0xff]
    %v168 = vld [vmem:[%s160 + $0x70] sm:$0xff]
    %v169 = vld [vmem:[%s160 + $0x90] sm:$0xff]
    %v170 = vld [vmem:[%s160 + $0xa0] sm:$0xff]
    %v171 = vld [vmem:[%s160 + $0xb0] sm:$0xff]
    %v172 = vld [vmem:[%s160 + $0xc0] sm:$0xff]
    %v173 = vld [vmem:[%s160 + $0xd0] sm:$0xff]
    %v174 = vld [vmem:[%s160 + $0xe0] sm:$0xff]
    %v175 = vld [vmem:[%s160 + $0xf0] sm:$0xff]
    %v176 = vld [vmem:[%s160 + $0x100] sm:$0xff]
    %v177 = vpack.c.bf16 %v162, %v161
    %v178 = vpack.c.bf16 %v164, %v163
    %v179 = vpack.c.bf16 %v166, %v165
    %v180 = vpack.c.bf16 %v168, %v167
    %v181 = vpack.c.bf16 %v170, %v169
    %v182 = vpack.c.bf16 %v172, %v171
    %v183 = vpack.c.bf16 %v174, %v173
    %v184 = vpack.c.bf16 %v176, %v175
    %s185 = scalar_lea.vmem %s0, 304
    %v186 = vld [vmem:[%s185] sm:$0xff]
    %v187 = vld [vmem:[%s185 + $0x10] sm:$0xff]
    %v188 = vld [vmem:[%s185 + $0x20] sm:$0xff]
    %v189 = vld [vmem:[%s185 + $0x30] sm:$0xff]
    %v190 = vld [vmem:[%s185 + $0x40] sm:$0xff]
    %v191 = vld [vmem:[%s185 + $0x50] sm:$0xff]
    %v192 = vld [vmem:[%s185 + $0x60] sm:$0xff]
    %v193 = vld [vmem:[%s185 + $0x70] sm:$0xff]
    %v194 = vld [vmem:[%s185 + $0x90] sm:$0xff]
    %v195 = vld [vmem:[%s185 + $0xa0] sm:$0xff]
    %v196 = vld [vmem:[%s185 + $0xb0] sm:$0xff]
    %v197 = vld [vmem:[%s185 + $0xc0] sm:$0xff]
    %v198 = vld [vmem:[%s185 + $0xd0] sm:$0xff]
    %v199 = vld [vmem:[%s185 + $0xe0] sm:$0xff]
    %v200 = vld [vmem:[%s185 + $0xf0] sm:$0xff]
    %v201 = vld [vmem:[%s185 + $0x100] sm:$0xff]
    %v202 = vpack.c.bf16 %v187, %v186
    %v203 = vpack.c.bf16 %v189, %v188
    %v204 = vpack.c.bf16 %v191, %v190
    %v205 = vpack.c.bf16 %v193, %v192
    %v206 = vpack.c.bf16 %v195, %v194
    %v207 = vpack.c.bf16 %v197, %v196
    %v208 = vpack.c.bf16 %v199, %v198
    %v209 = vpack.c.bf16 %v201, %v200
    %v210 = vld [vmem:[%s160 + $0x1] sm:$0xff]
    %v211 = vld [vmem:[%s160 + $0x11] sm:$0xff]
    %v212 = vld [vmem:[%s160 + $0x21] sm:$0xff]
    %v213 = vld [vmem:[%s160 + $0x31] sm:$0xff]
    %v214 = vld [vmem:[%s160 + $0x41] sm:$0xff]
    %v215 = vld [vmem:[%s160 + $0x51] sm:$0xff]
    %v216 = vld [vmem:[%s160 + $0x61] sm:$0xff]
    %v217 = vld [vmem:[%s160 + $0x71] sm:$0xff]
    %v218 = vld [vmem:[%s160 + $0x91] sm:$0xff]
    %v219 = vld [vmem:[%s160 + $0xa1] sm:$0xff]
    %v220 = vld [vmem:[%s160 + $0xb1] sm:$0xff]
    %v221 = vld [vmem:[%s160 + $0xc1] sm:$0xff]
    %v222 = vld [vmem:[%s160 + $0xd1] sm:$0xff]
    %v223 = vld [vmem:[%s160 + $0xe1] sm:$0xff]
    %v224 = vld [vmem:[%s160 + $0xf1] sm:$0xff]
    %v225 = vld [vmem:[%s160 + $0x101] sm:$0xff]
    %v226 = vpack.c.bf16 %v211, %v210
    %v227 = vpack.c.bf16 %v213, %v212
    %v228 = vpack.c.bf16 %v215, %v214
    %v229 = vpack.c.bf16 %v217, %v216
    %v230 = vpack.c.bf16 %v219, %v218
    %v231 = vpack.c.bf16 %v221, %v220
    %v232 = vpack.c.bf16 %v223, %v222
    %v233 = vpack.c.bf16 %v225, %v224
    %v234 = vld [vmem:[%s1] sm:$0xff]
    %v235 = vld [vmem:[%s1 + $0x8] sm:$0xff]
    %v236 = vld [vmem:[%s1 + $0x10] sm:$0xff]
    %v237 = vld [vmem:[%s1 + $0x18] sm:$0xff]
    %v238 = vld [vmem:[%s1 + $0x20] sm:$0xff]
    %v239 = vld [vmem:[%s1 + $0x28] sm:$0xff]
    %v240 = vld [vmem:[%s1 + $0x30] sm:$0xff]
    %v241 = vld [vmem:[%s1 + $0x38] sm:$0xff]
    %v242 = vld [vmem:[%s1 + $0x40] sm:$0xff]
    %v243 = vld [vmem:[%s1 + $0x48] sm:$0xff]
    %v244 = vld [vmem:[%s1 + $0x50] sm:$0xff]
    %v245 = vld [vmem:[%s1 + $0x58] sm:$0xff]
    %v246 = vld [vmem:[%s1 + $0x60] sm:$0xff]
    %v247 = vld [vmem:[%s1 + $0x68] sm:$0xff]
    %v248 = vld [vmem:[%s1 + $0x70] sm:$0xff]
    %v249 = vld [vmem:[%s1 + $0x78] sm:$0xff]
    %v250 = vld [vmem:[%s1 + $0x80] sm:$0xff]
    %v251 = vld [vmem:[%s1 + $0x88] sm:$0xff]
    %v252 = vld [vmem:[%s1 + $0x90] sm:$0xff]
    %v253 = vld [vmem:[%s1 + $0x98] sm:$0xff]
    %v254 = vld [vmem:[%s1 + $0xa0] sm:$0xff]
    %v255 = vld [vmem:[%s1 + $0xa8] sm:$0xff]
    %v256 = vld [vmem:[%s1 + $0xb0] sm:$0xff]
    %v257 = vld [vmem:[%s1 + $0xb8] sm:$0xff]
    %v258 = vld [vmem:[%s1 + $0xc0] sm:$0xff]
    %v259 = vld [vmem:[%s1 + $0xc8] sm:$0xff]
    %v260 = vld [vmem:[%s1 + $0xd0] sm:$0xff]
    %v261 = vld [vmem:[%s1 + $0xd8] sm:$0xff]
    %v262 = vld [vmem:[%s1 + $0xe0] sm:$0xff]
    %v263 = vld [vmem:[%s1 + $0xe8] sm:$0xff]
    %v264 = vld [vmem:[%s1 + $0xf0] sm:$0xff]
    %v265 = vld [vmem:[%s1 + $0xf8] sm:$0xff]
    %v266 = vld [vmem:[%s1 + $0x100] sm:$0xff]
    %v267 = vld [vmem:[%s1 + $0x108] sm:$0xff]
    %v268 = vld [vmem:[%s1 + $0x110] sm:$0xff]
    %v269 = vld [vmem:[%s1 + $0x118] sm:$0xff]
    %v270 = vld [vmem:[%s1 + $0x120] sm:$0xff]
    %v271 = vld [vmem:[%s1 + $0x128] sm:$0xff]
    %v272 = vld [vmem:[%s1 + $0x130] sm:$0xff]
    %v273 = vld [vmem:[%s1 + $0x138] sm:$0xff]
    %v274 = vld [vmem:[%s1 + $0x140] sm:$0xff]
    %v275 = vld [vmem:[%s1 + $0x148] sm:$0xff]
    %v276 = vld [vmem:[%s1 + $0x150] sm:$0xff]
    %v277 = vld [vmem:[%s1 + $0x158] sm:$0xff]
    %v278 = vld [vmem:[%s1 + $0x160] sm:$0xff]
    %v279 = vld [vmem:[%s1 + $0x168] sm:$0xff]
    %v280 = vld [vmem:[%s1 + $0x170] sm:$0xff]
    %v281 = vld [vmem:[%s1 + $0x178] sm:$0xff]
    %v282 = vld [vmem:[%s1 + $0x180] sm:$0xff]
    %v283 = vld [vmem:[%s1 + $0x188] sm:$0xff]
    %v284 = vld [vmem:[%s1 + $0x190] sm:$0xff]
    %v285 = vld [vmem:[%s1 + $0x198] sm:$0xff]
    %v286 = vld [vmem:[%s1 + $0x1a0] sm:$0xff]
    %v287 = vld [vmem:[%s1 + $0x1a8] sm:$0xff]
    %v288 = vld [vmem:[%s1 + $0x1b0] sm:$0xff]
    %v289 = vld [vmem:[%s1 + $0x1b8] sm:$0xff]
    %v290 = vld [vmem:[%s1 + $0x1c0] sm:$0xff]
    %v291 = vld [vmem:[%s1 + $0x1c8] sm:$0xff]
    %v292 = vld [vmem:[%s1 + $0x1d0] sm:$0xff]
    %v293 = vld [vmem:[%s1 + $0x1d8] sm:$0xff]
    %v294 = vld [vmem:[%s1 + $0x1e0] sm:$0xff]
    %v295 = vld [vmem:[%s1 + $0x1e8] sm:$0xff]
    %v296 = vld [vmem:[%s1 + $0x1f0] sm:$0xff]
    %v297 = vld [vmem:[%s1 + $0x1f8] sm:$0xff]
    %v298 = vld [vmem:[%s1 + $0x200] sm:$0xff]
    %v299 = vld [vmem:[%s1 + $0x208] sm:$0xff]
    %v300 = vld [vmem:[%s1 + $0x210] sm:$0xff]
    %v301 = vld [vmem:[%s1 + $0x218] sm:$0xff]
    %v302 = vld [vmem:[%s1 + $0x220] sm:$0xff]
    %v303 = vld [vmem:[%s1 + $0x228] sm:$0xff]
    %v304 = vld [vmem:[%s1 + $0x230] sm:$0xff]
    %v305 = vld [vmem:[%s1 + $0x238] sm:$0xff]
    %v306 = vld [vmem:[%s1 + $0x240] sm:$0xff]
    %v307 = vld [vmem:[%s1 + $0x248] sm:$0xff]
    %v308 = vld [vmem:[%s1 + $0x250] sm:$0xff]
    %v309 = vld [vmem:[%s1 + $0x258] sm:$0xff]
    %v310 = vld [vmem:[%s1 + $0x260] sm:$0xff]
    %v311 = vld [vmem:[%s1 + $0x268] sm:$0xff]
    %v312 = vld [vmem:[%s1 + $0x270] sm:$0xff]
    %v313 = vld [vmem:[%s1 + $0x278] sm:$0xff]
    %v314 = vld [vmem:[%s1 + $0x280] sm:$0xff]
    %v315 = vld [vmem:[%s1 + $0x288] sm:$0xff]
    %v316 = vld [vmem:[%s1 + $0x290] sm:$0xff]
    %v317 = vld [vmem:[%s1 + $0x298] sm:$0xff]
    %v318 = vld [vmem:[%s1 + $0x2a0] sm:$0xff]
    %v319 = vld [vmem:[%s1 + $0x2a8] sm:$0xff]
    %v320 = vld [vmem:[%s1 + $0x2b0] sm:$0xff]
    %v321 = vld [vmem:[%s1 + $0x2b8] sm:$0xff]
    %v322 = vld [vmem:[%s1 + $0x2c0] sm:$0xff]
    %v323 = vld [vmem:[%s1 + $0x2c8] sm:$0xff]
    %v324 = vld [vmem:[%s1 + $0x2d0] sm:$0xff]
    %v325 = vld [vmem:[%s1 + $0x2d8] sm:$0xff]
    %v326 = vld [vmem:[%s1 + $0x2e0] sm:$0xff]
    %v327 = vld [vmem:[%s1 + $0x2e8] sm:$0xff]
    %v328 = vld [vmem:[%s1 + $0x2f0] sm:$0xff]
    %v329 = vld [vmem:[%s1 + $0x2f8] sm:$0xff]
    %v330 = vld [vmem:[%s1 + $0x300] sm:$0xff]
    %v331 = vld [vmem:[%s1 + $0x308] sm:$0xff]
    %v332 = vld [vmem:[%s1 + $0x310] sm:$0xff]
    %v333 = vld [vmem:[%s1 + $0x318] sm:$0xff]
    %v334 = vld [vmem:[%s1 + $0x320] sm:$0xff]
    %v335 = vld [vmem:[%s1 + $0x328] sm:$0xff]
    %v336 = vld [vmem:[%s1 + $0x330] sm:$0xff]
    %v337 = vld [vmem:[%s1 + $0x338] sm:$0xff]
    %v338 = vld [vmem:[%s1 + $0x340] sm:$0xff]
    %v339 = vld [vmem:[%s1 + $0x348] sm:$0xff]
    %v340 = vld [vmem:[%s1 + $0x350] sm:$0xff]
    %v341 = vld [vmem:[%s1 + $0x358] sm:$0xff]
    %v342 = vld [vmem:[%s1 + $0x360] sm:$0xff]
    %v343 = vld [vmem:[%s1 + $0x368] sm:$0xff]
    %v344 = vld [vmem:[%s1 + $0x370] sm:$0xff]
    %v345 = vld [vmem:[%s1 + $0x378] sm:$0xff]
    %v346 = vld [vmem:[%s1 + $0x380] sm:$0xff]
    %v347 = vld [vmem:[%s1 + $0x388] sm:$0xff]
    %v348 = vld [vmem:[%s1 + $0x390] sm:$0xff]
    %v349 = vld [vmem:[%s1 + $0x398] sm:$0xff]
    %v350 = vld [vmem:[%s1 + $0x3a0] sm:$0xff]
    %v351 = vld [vmem:[%s1 + $0x3a8] sm:$0xff]
    %v352 = vld [vmem:[%s1 + $0x3b0] sm:$0xff]
    %v353 = vld [vmem:[%s1 + $0x3b8] sm:$0xff]
    %v354 = vld [vmem:[%s1 + $0x3c0] sm:$0xff]
    %v355 = vld [vmem:[%s1 + $0x3c8] sm:$0xff]
    %v356 = vld [vmem:[%s1 + $0x3d0] sm:$0xff]
    %v357 = vld [vmem:[%s1 + $0x3d8] sm:$0xff]
    %v358 = vld [vmem:[%s1 + $0x3e0] sm:$0xff]
    %v359 = vld [vmem:[%s1 + $0x3e8] sm:$0xff]
    %v360 = vld [vmem:[%s1 + $0x3f0] sm:$0xff]
    %v361 = vld [vmem:[%s1 + $0x3f8] sm:$0xff]
    %v362 = vld [vmem:[%s1 + $0x400] sm:$0xff]
    %v363 = vld [vmem:[%s1 + $0x408] sm:$0xff]
    %v364 = vld [vmem:[%s1 + $0x410] sm:$0xff]
    %v365 = vld [vmem:[%s1 + $0x418] sm:$0xff]
    %v366 = vld [vmem:[%s1 + $0x420] sm:$0xff]
    %v367 = vld [vmem:[%s1 + $0x428] sm:$0xff]
    %v368 = vld [vmem:[%s1 + $0x430] sm:$0xff]
    %v369 = vld [vmem:[%s1 + $0x438] sm:$0xff]
    %v370 = vld [vmem:[%s1 + $0x440] sm:$0xff]
    %v371 = vld [vmem:[%s1 + $0x448] sm:$0xff]
    %v372 = vld [vmem:[%s1 + $0x450] sm:$0xff]
    %v373 = vld [vmem:[%s1 + $0x458] sm:$0xff]
    %v374 = vld [vmem:[%s1 + $0x460] sm:$0xff]
    %v375 = vld [vmem:[%s1 + $0x468] sm:$0xff]
    %v376 = vld [vmem:[%s1 + $0x470] sm:$0xff]
    %v377 = vld [vmem:[%s1 + $0x478] sm:$0xff]
    %v522 = vunpack.c.l.b16 %v234
    %v523 = vunpack.c.h.b16 %v234
    %v524 = vunpack.c.l.b16 %v235
    %v525 = vunpack.c.h.b16 %v235
    %v526 = vunpack.c.l.b16 %v236
    %v527 = vunpack.c.h.b16 %v236
    %v528 = vunpack.c.l.b16 %v237
    %v529 = vunpack.c.h.b16 %v237
    %v530 = vunpack.c.l.b16 %v238
    %v531 = vunpack.c.h.b16 %v238
    %v532 = vunpack.c.l.b16 %v239
    %v533 = vunpack.c.h.b16 %v239
    %v534 = vunpack.c.l.b16 %v240
    %v535 = vunpack.c.h.b16 %v240
    %v536 = vunpack.c.l.b16 %v241
    %v537 = vunpack.c.h.b16 %v241
    %v538 = vunpack.c.l.b16 %v242
    %v539 = vunpack.c.h.b16 %v242
    %v540 = vunpack.c.l.b16 %v243
    %v541 = vunpack.c.h.b16 %v243
    %v542 = vunpack.c.l.b16 %v244
    %v543 = vunpack.c.h.b16 %v244
    %v544 = vunpack.c.l.b16 %v245
    %v545 = vunpack.c.h.b16 %v245
    %v546 = vunpack.c.l.b16 %v246
    %v547 = vunpack.c.h.b16 %v246
    %v548 = vunpack.c.l.b16 %v247
    %v549 = vunpack.c.h.b16 %v247
    %v550 = vunpack.c.l.b16 %v248
    %v551 = vunpack.c.h.b16 %v248
    %v552 = vunpack.c.l.b16 %v249
    %v553 = vunpack.c.h.b16 %v249
    %v554 = vunpack.c.l.b16 %v250
    %v555 = vunpack.c.h.b16 %v250
    %v556 = vunpack.c.l.b16 %v251
    %v557 = vunpack.c.h.b16 %v251
    %v558 = vunpack.c.l.b16 %v252
    %v559 = vunpack.c.h.b16 %v252
    %v560 = vunpack.c.l.b16 %v253
    %v561 = vunpack.c.h.b16 %v253
    %v562 = vunpack.c.l.b16 %v254
    %v563 = vunpack.c.h.b16 %v254
    %v564 = vunpack.c.l.b16 %v255
    %v565 = vunpack.c.h.b16 %v255
    %v566 = vunpack.c.l.b16 %v256
    %v567 = vunpack.c.h.b16 %v256
    %v568 = vunpack.c.l.b16 %v257
    %v569 = vunpack.c.h.b16 %v257
    %v570 = vunpack.c.l.b16 %v258
    %v571 = vunpack.c.h.b16 %v258
    %v572 = vunpack.c.l.b16 %v259
    %v573 = vunpack.c.h.b16 %v259
    %v574 = vunpack.c.l.b16 %v260
    %v575 = vunpack.c.h.b16 %v260
    %v576 = vunpack.c.l.b16 %v261
    %v577 = vunpack.c.h.b16 %v261
    %v578 = vunpack.c.l.b16 %v262
    %v579 = vunpack.c.h.b16 %v262
    %v580 = vunpack.c.l.b16 %v263
    %v581 = vunpack.c.h.b16 %v263
    %v582 = vunpack.c.l.b16 %v264
    %v583 = vunpack.c.h.b16 %v264
    %v584 = vunpack.c.l.b16 %v265
    %v585 = vunpack.c.h.b16 %v265
    %v586 = vunpack.c.l.b16 %v266
    %v587 = vunpack.c.h.b16 %v266
    %v588 = vunpack.c.l.b16 %v267
    %v589 = vunpack.c.h.b16 %v267
    %v590 = vunpack.c.l.b16 %v268
    %v591 = vunpack.c.h.b16 %v268
    %v592 = vunpack.c.l.b16 %v269
    %v593 = vunpack.c.h.b16 %v269
    %v594 = vunpack.c.l.b16 %v270
    %v595 = vunpack.c.h.b16 %v270
    %v596 = vunpack.c.l.b16 %v271
    %v597 = vunpack.c.h.b16 %v271
    %v598 = vunpack.c.l.b16 %v272
    %v599 = vunpack.c.h.b16 %v272
    %v600 = vunpack.c.l.b16 %v273
    %v601 = vunpack.c.h.b16 %v273
    %v602 = vunpack.c.l.b16 %v274
    %v603 = vunpack.c.h.b16 %v274
    %v604 = vunpack.c.l.b16 %v275
    %v605 = vunpack.c.h.b16 %v275
    %v606 = vunpack.c.l.b16 %v276
    %v607 = vunpack.c.h.b16 %v276
    %v608 = vunpack.c.l.b16 %v277
    %v609 = vunpack.c.h.b16 %v277
    %v610 = vunpack.c.l.b16 %v278
    %v611 = vunpack.c.h.b16 %v278
    %v612 = vunpack.c.l.b16 %v279
    %v613 = vunpack.c.h.b16 %v279
    %v614 = vunpack.c.l.b16 %v280
    %v615 = vunpack.c.h.b16 %v280
    %v616 = vunpack.c.l.b16 %v281
    %v617 = vunpack.c.h.b16 %v281
    %v618 = vunpack.c.l.b16 %v282
    %v619 = vunpack.c.h.b16 %v282
    %v620 = vunpack.c.l.b16 %v283
    %v621 = vunpack.c.h.b16 %v283
    %v622 = vunpack.c.l.b16 %v284
    %v623 = vunpack.c.h.b16 %v284
    %v624 = vunpack.c.l.b16 %v285
    %v625 = vunpack.c.h.b16 %v285
    %v626 = vunpack.c.l.b16 %v286
    %v627 = vunpack.c.h.b16 %v286
    %v628 = vunpack.c.l.b16 %v287
    %v629 = vunpack.c.h.b16 %v287
    %v630 = vunpack.c.l.b16 %v288
    %v631 = vunpack.c.h.b16 %v288
    %v632 = vunpack.c.l.b16 %v289
    %v633 = vunpack.c.h.b16 %v289
    %v634 = vunpack.c.l.b16 %v290
    %v635 = vunpack.c.h.b16 %v290
    %v636 = vunpack.c.l.b16 %v291
    %v637 = vunpack.c.h.b16 %v291
    %v638 = vunpack.c.l.b16 %v292
    %v639 = vunpack.c.h.b16 %v292
    %v640 = vunpack.c.l.b16 %v293
    %v641 = vunpack.c.h.b16 %v293
    %v642 = vunpack.c.l.b16 %v294
    %v643 = vunpack.c.h.b16 %v294
    %v644 = vunpack.c.l.b16 %v295
    %v645 = vunpack.c.h.b16 %v295
    %v646 = vunpack.c.l.b16 %v296
    %v647 = vunpack.c.h.b16 %v296
    %v648 = vunpack.c.l.b16 %v297
    %v649 = vunpack.c.h.b16 %v297
    %v650 = vunpack.c.l.b16 %v298
    %v651 = vunpack.c.h.b16 %v298
    %v652 = vunpack.c.l.b16 %v299
    %v653 = vunpack.c.h.b16 %v299
    %v654 = vunpack.c.l.b16 %v300
    %v655 = vunpack.c.h.b16 %v300
    %v656 = vunpack.c.l.b16 %v301
    %v657 = vunpack.c.h.b16 %v301
    %v658 = vunpack.c.l.b16 %v302
    %v659 = vunpack.c.h.b16 %v302
    %v660 = vunpack.c.l.b16 %v303
    %v661 = vunpack.c.h.b16 %v303
    %v662 = vunpack.c.l.b16 %v304
    %v663 = vunpack.c.h.b16 %v304
    %v664 = vunpack.c.l.b16 %v305
    %v665 = vunpack.c.h.b16 %v305
    %v666 = vunpack.c.l.b16 %v306
    %v667 = vunpack.c.h.b16 %v306
    %v668 = vunpack.c.l.b16 %v307
    %v669 = vunpack.c.h.b16 %v307
    %v670 = vunpack.c.l.b16 %v308
    %v671 = vunpack.c.h.b16 %v308
    %v672 = vunpack.c.l.b16 %v309
    %v673 = vunpack.c.h.b16 %v309
    %v674 = vunpack.c.l.b16 %v310
    %v675 = vunpack.c.h.b16 %v310
    %v676 = vunpack.c.l.b16 %v311
    %v677 = vunpack.c.h.b16 %v311
    %v678 = vunpack.c.l.b16 %v312
    %v679 = vunpack.c.h.b16 %v312
    %v680 = vunpack.c.l.b16 %v313
    %v681 = vunpack.c.h.b16 %v313
    %v682 = vunpack.c.l.b16 %v314
    %v683 = vunpack.c.h.b16 %v314
    %v684 = vunpack.c.l.b16 %v315
    %v685 = vunpack.c.h.b16 %v315
    %v686 = vunpack.c.l.b16 %v316
    %v687 = vunpack.c.h.b16 %v316
    %v688 = vunpack.c.l.b16 %v317
    %v689 = vunpack.c.h.b16 %v317
    %v690 = vunpack.c.l.b16 %v318
    %v691 = vunpack.c.h.b16 %v318
    %v692 = vunpack.c.l.b16 %v319
    %v693 = vunpack.c.h.b16 %v319
    %v694 = vunpack.c.l.b16 %v320
    %v695 = vunpack.c.h.b16 %v320
    %v696 = vunpack.c.l.b16 %v321
    %v697 = vunpack.c.h.b16 %v321
    %v698 = vunpack.c.l.b16 %v322
    %v699 = vunpack.c.h.b16 %v322
    %v700 = vunpack.c.l.b16 %v323
    %v701 = vunpack.c.h.b16 %v323
    %v702 = vunpack.c.l.b16 %v324
    %v703 = vunpack.c.h.b16 %v324
    %v704 = vunpack.c.l.b16 %v325
    %v705 = vunpack.c.h.b16 %v325
    %v706 = vunpack.c.l.b16 %v326
    %v707 = vunpack.c.h.b16 %v326
    %v708 = vunpack.c.l.b16 %v327
    %v709 = vunpack.c.h.b16 %v327
    %v710 = vunpack.c.l.b16 %v328
    %v711 = vunpack.c.h.b16 %v328
    %v712 = vunpack.c.l.b16 %v329
    %v713 = vunpack.c.h.b16 %v329
    %v714 = vunpack.c.l.b16 %v330
    %v715 = vunpack.c.h.b16 %v330
    %v716 = vunpack.c.l.b16 %v331
    %v717 = vunpack.c.h.b16 %v331
    %v718 = vunpack.c.l.b16 %v332
    %v719 = vunpack.c.h.b16 %v332
    %v720 = vunpack.c.l.b16 %v333
    %v721 = vunpack.c.h.b16 %v333
    %v722 = vunpack.c.l.b16 %v334
    %v723 = vunpack.c.h.b16 %v334
    %v724 = vunpack.c.l.b16 %v335
    %v725 = vunpack.c.h.b16 %v335
    %v726 = vunpack.c.l.b16 %v336
    %v727 = vunpack.c.h.b16 %v336
    %v728 = vunpack.c.l.b16 %v337
    %v729 = vunpack.c.h.b16 %v337
    %v730 = vunpack.c.l.b16 %v338
    %v731 = vunpack.c.h.b16 %v338
    %v732 = vunpack.c.l.b16 %v339
    %v733 = vunpack.c.h.b16 %v339
    %v734 = vunpack.c.l.b16 %v340
    %v735 = vunpack.c.h.b16 %v340
    %v736 = vunpack.c.l.b16 %v341
    %v737 = vunpack.c.h.b16 %v341
    %v738 = vunpack.c.l.b16 %v342
    %v739 = vunpack.c.h.b16 %v342
    %v740 = vunpack.c.l.b16 %v343
    %v741 = vunpack.c.h.b16 %v343
    %v742 = vunpack.c.l.b16 %v344
    %v743 = vunpack.c.h.b16 %v344
    %v744 = vunpack.c.l.b16 %v345
    %v745 = vunpack.c.h.b16 %v345
    %v746 = vunpack.c.l.b16 %v346
    %v747 = vunpack.c.h.b16 %v346
    %v748 = vunpack.c.l.b16 %v347
    %v749 = vunpack.c.h.b16 %v347
    %v750 = vunpack.c.l.b16 %v348
    %v751 = vunpack.c.h.b16 %v348
    %v752 = vunpack.c.l.b16 %v349
    %v753 = vunpack.c.h.b16 %v349
    %v754 = vunpack.c.l.b16 %v350
    %v755 = vunpack.c.h.b16 %v350
    %v756 = vunpack.c.l.b16 %v351
    %v757 = vunpack.c.h.b16 %v351
    %v758 = vunpack.c.l.b16 %v352
    %v759 = vunpack.c.h.b16 %v352
    %v760 = vunpack.c.l.b16 %v353
    %v761 = vunpack.c.h.b16 %v353
    %v762 = vunpack.c.l.b16 %v354
    %v763 = vunpack.c.h.b16 %v354
    %v764 = vunpack.c.l.b16 %v355
    %v765 = vunpack.c.h.b16 %v355
    %v766 = vunpack.c.l.b16 %v356
    %v767 = vunpack.c.h.b16 %v356
    %v768 = vunpack.c.l.b16 %v357
    %v769 = vunpack.c.h.b16 %v357
    %v770 = vunpack.c.l.b16 %v358
    %v771 = vunpack.c.h.b16 %v358
    %v772 = vunpack.c.l.b16 %v359
    %v773 = vunpack.c.h.b16 %v359
    %v774 = vunpack.c.l.b16 %v360
    %v775 = vunpack.c.h.b16 %v360
    %v776 = vunpack.c.l.b16 %v361
    %v777 = vunpack.c.h.b16 %v361
    %v778 = vunpack.c.l.b16 %v362
    %v779 = vunpack.c.h.b16 %v362
    %v780 = vunpack.c.l.b16 %v363
    %v781 = vunpack.c.h.b16 %v363
    %v782 = vunpack.c.l.b16 %v364
    %v783 = vunpack.c.h.b16 %v364
    %v784 = vunpack.c.l.b16 %v365
    %v785 = vunpack.c.h.b16 %v365
    %v786 = vunpack.c.l.b16 %v366
    %v787 = vunpack.c.h.b16 %v366
    %v788 = vunpack.c.l.b16 %v367
    %v789 = vunpack.c.h.b16 %v367
    %v790 = vunpack.c.l.b16 %v368
    %v791 = vunpack.c.h.b16 %v368
    %v792 = vunpack.c.l.b16 %v369
    %v793 = vunpack.c.h.b16 %v369
    %v794 = vunpack.c.l.b16 %v370
    %v795 = vunpack.c.h.b16 %v370
    %v796 = vunpack.c.l.b16 %v371
    %v797 = vunpack.c.h.b16 %v371
    %v798 = vunpack.c.l.b16 %v372
    %v799 = vunpack.c.h.b16 %v372
    %v800 = vunpack.c.l.b16 %v373
    %v801 = vunpack.c.h.b16 %v373
    %v802 = vunpack.c.l.b16 %v374
    %v803 = vunpack.c.h.b16 %v374
    %v804 = vunpack.c.l.b16 %v375
    %v805 = vunpack.c.h.b16 %v375
    %v806 = vunpack.c.l.b16 %v376
    %v807 = vunpack.c.h.b16 %v376
    %v808 = vunpack.c.l.b16 %v377
    %v809 = vunpack.c.h.b16 %v377
    %v810 = vpack.c.b16 %v524, %v522
    %v811 = vpack.c.b16 %v525, %v523
    %v812 = vpack.c.b16 %v528, %v526
    %v813 = vpack.c.b16 %v529, %v527
    %v814 = vpack.c.b16 %v532, %v530
    %v815 = vpack.c.b16 %v533, %v531
    %v816 = vpack.c.b16 %v536, %v534
    %v817 = vpack.c.b16 %v537, %v535
    %v818 = vpack.c.b16 %v540, %v538
    %v819 = vpack.c.b16 %v541, %v539
    %v820 = vpack.c.b16 %v544, %v542
    %v821 = vpack.c.b16 %v545, %v543
    %v822 = vpack.c.b16 %v548, %v546
    %v823 = vpack.c.b16 %v549, %v547
    %v824 = vpack.c.b16 %v552, %v550
    %v825 = vpack.c.b16 %v553, %v551
    %v826 = vpack.c.b16 %v556, %v554
    %v827 = vpack.c.b16 %v557, %v555
    %v828 = vpack.c.b16 %v560, %v558
    %v829 = vpack.c.b16 %v561, %v559
    %v830 = vpack.c.b16 %v564, %v562
    %v831 = vpack.c.b16 %v565, %v563
    %v832 = vpack.c.b16 %v568, %v566
    %v833 = vpack.c.b16 %v569, %v567
    %v834 = vpack.c.b16 %v572, %v570
    %v835 = vpack.c.b16 %v573, %v571
    %v836 = vpack.c.b16 %v576, %v574
    %v837 = vpack.c.b16 %v577, %v575
    %v838 = vpack.c.b16 %v580, %v578
    %v839 = vpack.c.b16 %v581, %v579
    %v840 = vpack.c.b16 %v584, %v582
    %v841 = vpack.c.b16 %v585, %v583
    %v842 = vpack.c.b16 %v588, %v586
    %v843 = vpack.c.b16 %v589, %v587
    %v844 = vpack.c.b16 %v592, %v590
    %v845 = vpack.c.b16 %v593, %v591
    %v846 = vpack.c.b16 %v596, %v594
    %v847 = vpack.c.b16 %v597, %v595
    %v848 = vpack.c.b16 %v600, %v598
    %v849 = vpack.c.b16 %v601, %v599
    %v850 = vpack.c.b16 %v604, %v602
    %v851 = vpack.c.b16 %v605, %v603
    %v852 = vpack.c.b16 %v608, %v606
    %v853 = vpack.c.b16 %v609, %v607
    %v854 = vpack.c.b16 %v612, %v610
    %v855 = vpack.c.b16 %v613, %v611
    %v856 = vpack.c.b16 %v616, %v614
    %v857 = vpack.c.b16 %v617, %v615
    %v858 = vpack.c.b16 %v620, %v618
    %v859 = vpack.c.b16 %v621, %v619
    %v860 = vpack.c.b16 %v624, %v622
    %v861 = vpack.c.b16 %v625, %v623
    %v862 = vpack.c.b16 %v628, %v626
    %v863 = vpack.c.b16 %v629, %v627
    %v864 = vpack.c.b16 %v632, %v630
    %v865 = vpack.c.b16 %v633, %v631
    %v866 = vpack.c.b16 %v636, %v634
    %v867 = vpack.c.b16 %v637, %v635
    %v868 = vpack.c.b16 %v640, %v638
    %v869 = vpack.c.b16 %v641, %v639
    %v870 = vpack.c.b16 %v644, %v642
    %v871 = vpack.c.b16 %v645, %v643
    %v872 = vpack.c.b16 %v648, %v646
    %v873 = vpack.c.b16 %v649, %v647
    %v874 = vpack.c.b16 %v652, %v650
    %v875 = vpack.c.b16 %v653, %v651
    %v876 = vpack.c.b16 %v656, %v654
    %v877 = vpack.c.b16 %v657, %v655
    %v878 = vpack.c.b16 %v660, %v658
    %v879 = vpack.c.b16 %v661, %v659
    %v880 = vpack.c.b16 %v664, %v662
    %v881 = vpack.c.b16 %v665, %v663
    %v882 = vpack.c.b16 %v668, %v666
    %v883 = vpack.c.b16 %v669, %v667
    %v884 = vpack.c.b16 %v672, %v670
    %v885 = vpack.c.b16 %v673, %v671
    %v886 = vpack.c.b16 %v676, %v674
    %v887 = vpack.c.b16 %v677, %v675
    %v888 = vpack.c.b16 %v680, %v678
    %v889 = vpack.c.b16 %v681, %v679
    %v890 = vpack.c.b16 %v684, %v682
    %v891 = vpack.c.b16 %v685, %v683
    %v892 = vpack.c.b16 %v688, %v686
    %v893 = vpack.c.b16 %v689, %v687
    %v894 = vpack.c.b16 %v692, %v690
    %v895 = vpack.c.b16 %v693, %v691
    %v896 = vpack.c.b16 %v696, %v694
    %v897 = vpack.c.b16 %v697, %v695
    %v898 = vpack.c.b16 %v700, %v698
    %v899 = vpack.c.b16 %v701, %v699
    %v900 = vpack.c.b16 %v704, %v702
    %v901 = vpack.c.b16 %v705, %v703
    %v902 = vpack.c.b16 %v708, %v706
    %v903 = vpack.c.b16 %v709, %v707
    %v904 = vpack.c.b16 %v712, %v710
    %v905 = vpack.c.b16 %v713, %v711
    %v906 = vpack.c.b16 %v716, %v714
    %v907 = vpack.c.b16 %v717, %v715
    %v908 = vpack.c.b16 %v720, %v718
    %v909 = vpack.c.b16 %v721, %v719
    %v910 = vpack.c.b16 %v724, %v722
    %v911 = vpack.c.b16 %v725, %v723
    %v912 = vpack.c.b16 %v728, %v726
    %v913 = vpack.c.b16 %v729, %v727
    %v914 = vpack.c.b16 %v732, %v730
    %v915 = vpack.c.b16 %v733, %v731
    %v916 = vpack.c.b16 %v736, %v734
    %v917 = vpack.c.b16 %v737, %v735
    %v918 = vpack.c.b16 %v740, %v738
    %v919 = vpack.c.b16 %v741, %v739
    %v920 = vpack.c.b16 %v744, %v742
    %v921 = vpack.c.b16 %v745, %v743
    %v922 = vpack.c.b16 %v748, %v746
    %v923 = vpack.c.b16 %v749, %v747
    %v924 = vpack.c.b16 %v752, %v750
    %v925 = vpack.c.b16 %v753, %v751
    %v926 = vpack.c.b16 %v756, %v754
    %v927 = vpack.c.b16 %v757, %v755
    %v928 = vpack.c.b16 %v760, %v758
    %v929 = vpack.c.b16 %v761, %v759
    %v930 = vpack.c.b16 %v764, %v762
    %v931 = vpack.c.b16 %v765, %v763
    %v932 = vpack.c.b16 %v768, %v766
    %v933 = vpack.c.b16 %v769, %v767
    %v934 = vpack.c.b16 %v772, %v770
    %v935 = vpack.c.b16 %v773, %v771
    %v936 = vpack.c.b16 %v776, %v774
    %v937 = vpack.c.b16 %v777, %v775
    %v938 = vpack.c.b16 %v780, %v778
    %v939 = vpack.c.b16 %v781, %v779
    %v940 = vpack.c.b16 %v784, %v782
    %v941 = vpack.c.b16 %v785, %v783
    %v942 = vpack.c.b16 %v788, %v786
    %v943 = vpack.c.b16 %v789, %v787
    %v944 = vpack.c.b16 %v792, %v790
    %v945 = vpack.c.b16 %v793, %v791
    %v946 = vpack.c.b16 %v796, %v794
    %v947 = vpack.c.b16 %v797, %v795
    %v948 = vpack.c.b16 %v800, %v798
    %v949 = vpack.c.b16 %v801, %v799
    %v950 = vpack.c.b16 %v804, %v802
    %v951 = vpack.c.b16 %v805, %v803
    %v952 = vpack.c.b16 %v808, %v806
    %v953 = vpack.c.b16 %v809, %v807
    %1098 = vmatprep.subr.bf16.mxu0 %v811
    %1099 = vmatpush1.bf16.msra.mxu0 %v810
    %1100 = vmatprep.subr.bf16.mxu0 %v813
    %1101 = vmatpush1.bf16.msra.mxu0 %v812
    %1102 = vmatprep.subr.bf16.mxu0 %v815
    %1103 = vmatpush1.bf16.msra.mxu0 %v814
    %1104 = vmatprep.subr.bf16.mxu0 %v817
    %1105 = vmatpush1.bf16.msra.mxu0 %v816
    %1106 = vmatprep.subr.bf16.mxu0 %v819
    %1107 = vmatpush1.bf16.msra.mxu0 %v818
    %1108 = vmatprep.subr.bf16.mxu0 %v821
    %1109 = vmatpush1.bf16.msra.mxu0 %v820
    %1110 = vmatprep.subr.bf16.mxu0 %v823
    %1111 = vmatpush1.bf16.msra.mxu0 %v822
    %1112 = vmatprep.subr.bf16.mxu0 %v825
    %1113 = vmatpush1.bf16.msra.mxu0 %v824
    %1114 = vmatprep.subr.bf16.mxu0 %v827
    %1115 = vmatpush1.bf16.msra.mxu0 %v826
    %1116 = vmatprep.subr.bf16.mxu0 %v829
    %1117 = vmatpush1.bf16.msra.mxu0 %v828
    %1118 = vmatprep.subr.bf16.mxu0 %v831
    %1119 = vmatpush1.bf16.msra.mxu0 %v830
    %1120 = vmatprep.subr.bf16.mxu0 %v833
    %1121 = vmatpush1.bf16.msra.mxu0 %v832
    %1122 = vmatprep.subr.bf16.mxu0 %v835
    %1123 = vmatpush1.bf16.msra.mxu0 %v834
    %1124 = vmatprep.subr.bf16.mxu0 %v837
    %1125 = vmatpush1.bf16.msra.mxu0 %v836
    %1126 = vmatprep.subr.bf16.mxu0 %v839
    %1127 = vmatpush1.bf16.msra.mxu0 %v838
    %1128 = vmatprep.subr.bf16.mxu0 %v841
    %1129 = vmatpush1.bf16.msra.mxu0 %v840
    %1130 = vmatprep.mubr.bf16.mxu0 %v54
    %1131 = vmatmul.mubr.bf16.gmra.mrb[0].mxu0 %v29
    %v1132 = vpop.f32.mrb[0].mxu0
    %v1133 = vadd.f32 0.0, %v1132
    %v1134 = vpop.f32.mrb[0].mxu0
    %v1135 = vadd.f32 0.0, %v1134
    %v1136 = vpop.f32.mrb[0].mxu0
    %v1137 = vadd.f32 0.0, %v1136
    %v1138 = vpop.f32.mrb[0].mxu0
    %v1139 = vadd.f32 0.0, %v1138
    %1140 = vmatprep.mubr.bf16.mxu0 %v55
    %1141 = vmatmul.mubr.bf16.gmra.mrb[0].mxu0 %v30
    %v1142 = vpop.f32.mrb[0].mxu0
    %v1143 = vadd.f32 0.0, %v1142
    %v1144 = vpop.f32.mrb[0].mxu0
    %v1145 = vadd.f32 0.0, %v1144
    %v1146 = vpop.f32.mrb[0].mxu0
    %v1147 = vadd.f32 0.0, %v1146
    %v1148 = vpop.f32.mrb[0].mxu0
    %v1149 = vadd.f32 0.0, %v1148
    %1150 = vmatprep.mubr.bf16.mxu0 %v56
    %1151 = vmatmul.mubr.bf16.gmra.mrb[0].mxu0 %v31
    %v1152 = vpop.f32.mrb[0].mxu0
    %v1153 = vadd.f32 0.0, %v1152
    %v1154 = vpop.f32.mrb[0].mxu0
    %v1155 = vadd.f32 0.0, %v1154
    %v1156 = vpop.f32.mrb[0].mxu0
    %v1157 = vadd.f32 0.0, %v1156
    %v1158 = vpop.f32.mrb[0].mxu0
    %v1159 = vadd.f32 0.0, %v1158
    %1160 = vmatprep.mubr.bf16.mxu0 %v57
    %1161 = vmatmul.mubr.bf16.gmra.mrb[0].mxu0 %v32
    %v1162 = vpop.f32.mrb[0].mxu0
    %v1163 = vadd.f32 0.0, %v1162
    %v1164 = vpop.f32.mrb[0].mxu0
    %v1165 = vadd.f32 0.0, %v1164
    %v1166 = vpop.f32.mrb[0].mxu0
    %v1167 = vadd.f32 0.0, %v1166
    %v1168 = vpop.f32.mrb[0].mxu0
    %v1169 = vadd.f32 0.0, %v1168
    %1170 = vmatprep.mubr.bf16.mxu0 %v58
    %1171 = vmatmul.mubr.bf16.gmra.mrb[0].mxu0 %v33
    %v1172 = vpop.f32.mrb[0].mxu0
    %v1173 = vadd.f32 0.0, %v1172
    %v1174 = vpop.f32.mrb[0].mxu0
    %v1175 = vadd.f32 0.0, %v1174
    %v1176 = vpop.f32.mrb[0].mxu0
    %v1177 = vadd.f32 0.0, %v1176
    %v1178 = vpop.f32.mrb[0].mxu0
    %v1179 = vadd.f32 0.0, %v1178
    %1180 = vmatprep.mubr.bf16.mxu0 %v59
    %1181 = vmatmul.mubr.bf16.gmra.mrb[0].mxu0 %v34
    %v1182 = vpop.f32.mrb[0].mxu0
    %v1183 = vadd.f32 0.0, %v1182
    %v1184 = vpop.f32.mrb[0].mxu0
    %v1185 = vadd.f32 0.0, %v1184
    %v1186 = vpop.f32.mrb[0].mxu0
    %v1187 = vadd.f32 0.0, %v1186
    %v1188 = vpop.f32.mrb[0].mxu0
    %v1189 = vadd.f32 0.0, %v1188
    %1190 = vmatprep.mubr.bf16.mxu0 %v60
    %1191 = vmatmul.mubr.bf16.gmra.mrb[0].mxu0 %v35
    %v1192 = vpop.f32.mrb[0].mxu0
    %v1193 = vadd.f32 0.0, %v1192
    %v1194 = vpop.f32.mrb[0].mxu0
    %v1195 = vadd.f32 0.0, %v1194
    %v1196 = vpop.f32.mrb[0].mxu0
    %v1197 = vadd.f32 0.0, %v1196
    %v1198 = vpop.f32.mrb[0].mxu0
    %v1199 = vadd.f32 0.0, %v1198
    %1200 = vmatprep.mubr.bf16.mxu0 %v61
    %1201 = vmatmul.mubr.bf16.gmra.mrb[0].mxu0 %v36
    %v1202 = vpop.f32.mrb[0].mxu0
    %v1203 = vadd.f32 0.0, %v1202
    %v1204 = vpop.f32.mrb[0].mxu0
    %v1205 = vadd.f32 0.0, %v1204
    %v1206 = vpop.f32.mrb[0].mxu0
    %v1207 = vadd.f32 0.0, %v1206
    %v1208 = vpop.f32.mrb[0].mxu0
    %v1209 = vadd.f32 0.0, %v1208
    %1210 = vdwg.mxu0
    %1211 = vmatprep.subr.bf16.mxu0 %v843
    %1212 = vmatpush1.bf16.msra.mxu0 %v842
    %1213 = vmatprep.subr.bf16.mxu0 %v845
    %1214 = vmatpush1.bf16.msra.mxu0 %v844
    %1215 = vmatprep.subr.bf16.mxu0 %v847
    %1216 = vmatpush1.bf16.msra.mxu0 %v846
    %1217 = vmatprep.subr.bf16.mxu0 %v849
    %1218 = vmatpush1.bf16.msra.mxu0 %v848
    %1219 = vmatprep.subr.bf16.mxu0 %v851
    %1220 = vmatpush1.bf16.msra.mxu0 %v850
    %1221 = vmatprep.subr.bf16.mxu0 %v853
    %1222 = vmatpush1.bf16.msra.mxu0 %v852
    %1223 = vmatprep.subr.bf16.mxu0 %v855
    %1224 = vmatpush1.bf16.msra.mxu0 %v854
    %1225 = vmatprep.subr.bf16.mxu0 %v857
    %1226 = vmatpush1.bf16.msra.mxu0 %v856
    %1227 = vmatprep.subr.bf16.mxu0 %v859
    %1228 = vmatpush1.bf16.msra.mxu0 %v858
    %1229 = vmatprep.subr.bf16.mxu0 %v861
    %1230 = vmatpush1.bf16.msra.mxu0 %v860
    %1231 = vmatprep.subr.bf16.mxu0 %v863
    %1232 = vmatpush1.bf16.msra.mxu0 %v862
    %1233 = vmatprep.subr.bf16.mxu0 %v865
    %1234 = vmatpush1.bf16.msra.mxu0 %v864
    %1235 = vmatprep.subr.bf16.mxu0 %v867
    %1236 = vmatpush1.bf16.msra.mxu0 %v866
    %1237 = vmatprep.subr.bf16.mxu0 %v869
    %1238 = vmatpush1.bf16.msra.mxu0 %v868
    %1239 = vmatprep.subr.bf16.mxu0 %v871
    %1240 = vmatpush1.bf16.msra.mxu0 %v870
    %1241 = vmatprep.subr.bf16.mxu0 %v873
    %1242 = vmatpush1.bf16.msra.mxu0 %v872
    %1243 = vmatprep.mubr.bf16.mxu0 %v103
    %1244 = vmatmul.mubr.bf16.gmra.mrb[0].mxu0 %v78
    %v1245 = vpop.f32.mrb[0].mxu0
    %v1246 = vadd.f32 %v1133, %v1245
    %v1247 = vpop.f32.mrb[0].mxu0
    %v1248 = vadd.f32 %v1135, %v1247
    %v1249 = vpop.f32.mrb[0].mxu0
    %v1250 = vadd.f32 %v1137, %v1249
    %v1251 = vpop.f32.mrb[0].mxu0
    %v1252 = vadd.f32 %v1139, %v1251
    %1253 = vmatprep.mubr.bf16.mxu0 %v104
    %1254 = vmatmul.mubr.bf16.gmra.mrb[0].mxu0 %v79
    %v1255 = vpop.f32.mrb[0].mxu0
    %v1256 = vadd.f32 %v1143, %v1255
    %v1257 = vpop.f32.mrb[0].mxu0
    %v1258 = vadd.f32 %v1145, %v1257
    %v1259 = vpop.f32.mrb[0].mxu0
    %v1260 = vadd.f32 %v1147, %v1259
    %v1261 = vpop.f32.mrb[0].mxu0
    %v1262 = vadd.f32 %v1149, %v1261
    %1263 = vmatprep.mubr.bf16.mxu0 %v105
    %1264 = vmatmul.mubr.bf16.gmra.mrb[0].mxu0 %v80
    %v1265 = vpop.f32.mrb[0].mxu0
    %v1266 = vadd.f32 %v1153, %v1265
    %v1267 = vpop.f32.mrb[0].mxu0
    %v1268 = vadd.f32 %v1155, %v1267
    %v1269 = vpop.f32.mrb[0].mxu0
    %v1270 = vadd.f32 %v1157, %v1269
    %v1271 = vpop.f32.mrb[0].mxu0
    %v1272 = vadd.f32 %v1159, %v1271
    %1273 = vmatprep.mubr.bf16.mxu0 %v106
    %1274 = vmatmul.mubr.bf16.gmra.mrb[0].mxu0 %v81
    %v1275 = vpop.f32.mrb[0].mxu0
    %v1276 = vadd.f32 %v1163, %v1275
    %v1277 = vpop.f32.mrb[0].mxu0
    %v1278 = vadd.f32 %v1165, %v1277
    %v1279 = vpop.f32.mrb[0].mxu0
    %v1280 = vadd.f32 %v1167, %v1279
    %v1281 = vpop.f32.mrb[0].mxu0
    %v1282 = vadd.f32 %v1169, %v1281
    %1283 = vmatprep.mubr.bf16.mxu0 %v107
    %1284 = vmatmul.mubr.bf16.gmra.mrb[0].mxu0 %v82
    %v1285 = vpop.f32.mrb[0].mxu0
    %v1286 = vadd.f32 %v1173, %v1285
    %v1287 = vpop.f32.mrb[0].mxu0
    %v1288 = vadd.f32 %v1175, %v1287
    %v1289 = vpop.f32.mrb[0].mxu0
    %v1290 = vadd.f32 %v1177, %v1289
    %v1291 = vpop.f32.mrb[0].mxu0
    %v1292 = vadd.f32 %v1179, %v1291
    %1293 = vmatprep.mubr.bf16.mxu0 %v108
    %1294 = vmatmul.mubr.bf16.gmra.mrb[0].mxu0 %v83
    %v1295 = vpop.f32.mrb[0].mxu0
    %v1296 = vadd.f32 %v1183, %v1295
    %v1297 = vpop.f32.mrb[0].mxu0
    %v1298 = vadd.f32 %v1185, %v1297
    %v1299 = vpop.f32.mrb[0].mxu0
    %v1300 = vadd.f32 %v1187, %v1299
    %v1301 = vpop.f32.mrb[0].mxu0
    %v1302 = vadd.f32 %v1189, %v1301
    %1303 = vmatprep.mubr.bf16.mxu0 %v109
    %1304 = vmatmul.mubr.bf16.gmra.mrb[0].mxu0 %v84
    %v1305 = vpop.f32.mrb[0].mxu0
    %v1306 = vadd.f32 %v1193, %v1305
    %v1307 = vpop.f32.mrb[0].mxu0
    %v1308 = vadd.f32 %v1195, %v1307
    %v1309 = vpop.f32.mrb[0].mxu0
    %v1310 = vadd.f32 %v1197, %v1309
    %v1311 = vpop.f32.mrb[0].mxu0
    %v1312 = vadd.f32 %v1199, %v1311
    %1313 = vmatprep.mubr.bf16.mxu0 %v110
    %1314 = vmatmul.mubr.bf16.gmra.mrb[0].mxu0 %v85
    %v1315 = vpop.f32.mrb[0].mxu0
    %v1316 = vadd.f32 %v1203, %v1315
    %v1317 = vpop.f32.mrb[0].mxu0
    %v1318 = vadd.f32 %v1205, %v1317
    %v1319 = vpop.f32.mrb[0].mxu0
    %v1320 = vadd.f32 %v1207, %v1319
    %v1321 = vpop.f32.mrb[0].mxu0
    %v1322 = vadd.f32 %v1209, %v1321
    %1323 = vdwg.mxu0
    %1324 = vmatprep.subr.bf16.mxu0 %v875
    %1325 = vmatpush1.bf16.msra.mxu0 %v874
    %1326 = vmatprep.subr.bf16.mxu0 %v877
    %1327 = vmatpush1.bf16.msra.mxu0 %v876
    %1328 = vmatprep.subr.bf16.mxu0 %v879
    %1329 = vmatpush1.bf16.msra.mxu0 %v878
    %1330 = vmatprep.subr.bf16.mxu0 %v881
    %1331 = vmatpush1.bf16.msra.mxu0 %v880
    %1332 = vmatprep.subr.bf16.mxu0 %v883
    %1333 = vmatpush1.bf16.msra.mxu0 %v882
    %1334 = vmatprep.subr.bf16.mxu0 %v885
    %1335 = vmatpush1.bf16.msra.mxu0 %v884
    %1336 = vmatprep.subr.bf16.mxu0 %v887
    %1337 = vmatpush1.bf16.msra.mxu0 %v886
    %1338 = vmatprep.subr.bf16.mxu0 %v889
    %1339 = vmatpush1.bf16.msra.mxu0 %v888
    %1340 = vmatprep.subr.bf16.mxu0 %v891
    %1341 = vmatpush1.bf16.msra.mxu0 %v890
    %1342 = vmatprep.subr.bf16.mxu0 %v893
    %1343 = vmatpush1.bf16.msra.mxu0 %v892
    %1344 = vmatprep.subr.bf16.mxu0 %v895
    %1345 = vmatpush1.bf16.msra.mxu0 %v894
    %1346 = vmatprep.subr.bf16.mxu0 %v897
    %1347 = vmatpush1.bf16.msra.mxu0 %v896
    %1348 = vmatprep.subr.bf16.mxu0 %v899
    %1349 = vmatpush1.bf16.msra.mxu0 %v898
    %1350 = vmatprep.subr.bf16.mxu0 %v901
    %1351 = vmatpush1.bf16.msra.mxu0 %v900
    %1352 = vmatprep.subr.bf16.mxu0 %v903
    %1353 = vmatpush1.bf16.msra.mxu0 %v902
    %1354 = vmatprep.subr.bf16.mxu0 %v905
    %1355 = vmatpush1.bf16.msra.mxu0 %v904
    %1356 = vmatprep.mubr.bf16.mxu0 %v152
    %1357 = vmatmul.mubr.bf16.gmra.mrb[0].mxu0 %v128
    %v1358 = vpop.f32.mrb[0].mxu0
    %v1359 = vadd.f32 %v1246, %v1358
    %v1360 = vpop.f32.mrb[0].mxu0
    %v1361 = vadd.f32 %v1248, %v1360
    %v1362 = vpop.f32.mrb[0].mxu0
    %v1363 = vadd.f32 %v1250, %v1362
    %v1364 = vpop.f32.mrb[0].mxu0
    %v1365 = vadd.f32 %v1252, %v1364
    %1366 = vmatprep.mubr.bf16.mxu0 %v153
    %1367 = vmatmul.mubr.bf16.gmra.mrb[0].mxu0 %v129
    %v1368 = vpop.f32.mrb[0].mxu0
    %v1369 = vadd.f32 %v1256, %v1368
    %v1370 = vpop.f32.mrb[0].mxu0
    %v1371 = vadd.f32 %v1258, %v1370
    %v1372 = vpop.f32.mrb[0].mxu0
    %v1373 = vadd.f32 %v1260, %v1372
    %v1374 = vpop.f32.mrb[0].mxu0
    %v1375 = vadd.f32 %v1262, %v1374
    %1376 = vmatprep.mubr.bf16.mxu0 %v154
    %1377 = vmatmul.mubr.bf16.gmra.mrb[0].mxu0 %v130
    %v1378 = vpop.f32.mrb[0].mxu0
    %v1379 = vadd.f32 %v1266, %v1378
    %v1380 = vpop.f32.mrb[0].mxu0
    %v1381 = vadd.f32 %v1268, %v1380
    %v1382 = vpop.f32.mrb[0].mxu0
    %v1383 = vadd.f32 %v1270, %v1382
    %v1384 = vpop.f32.mrb[0].mxu0
    %v1385 = vadd.f32 %v1272, %v1384
    %1386 = vmatprep.mubr.bf16.mxu0 %v155
    %1387 = vmatmul.mubr.bf16.gmra.mrb[0].mxu0 %v131
    %v1388 = vpop.f32.mrb[0].mxu0
    %v1389 = vadd.f32 %v1276, %v1388
    %v1390 = vpop.f32.mrb[0].mxu0
    %v1391 = vadd.f32 %v1278, %v1390
    %v1392 = vpop.f32.mrb[0].mxu0
    %v1393 = vadd.f32 %v1280, %v1392
    %v1394 = vpop.f32.mrb[0].mxu0
    %v1395 = vadd.f32 %v1282, %v1394
    %1396 = vmatprep.mubr.bf16.mxu0 %v156
    %1397 = vmatmul.mubr.bf16.gmra.mrb[0].mxu0 %v132
    %v1398 = vpop.f32.mrb[0].mxu0
    %v1399 = vadd.f32 %v1286, %v1398
    %v1400 = vpop.f32.mrb[0].mxu0
    %v1401 = vadd.f32 %v1288, %v1400
    %v1402 = vpop.f32.mrb[0].mxu0
    %v1403 = vadd.f32 %v1290, %v1402
    %v1404 = vpop.f32.mrb[0].mxu0
    %v1405 = vadd.f32 %v1292, %v1404
    %1406 = vmatprep.mubr.bf16.mxu0 %v157
    %1407 = vmatmul.mubr.bf16.gmra.mrb[0].mxu0 %v133
    %v1408 = vpop.f32.mrb[0].mxu0
    %v1409 = vadd.f32 %v1296, %v1408
    %v1410 = vpop.f32.mrb[0].mxu0
    %v1411 = vadd.f32 %v1298, %v1410
    %v1412 = vpop.f32.mrb[0].mxu0
    %v1413 = vadd.f32 %v1300, %v1412
    %v1414 = vpop.f32.mrb[0].mxu0
    %v1415 = vadd.f32 %v1302, %v1414
    %1416 = vmatprep.mubr.bf16.mxu0 %v158
    %1417 = vmatmul.mubr.bf16.gmra.mrb[0].mxu0 %v134
    %v1418 = vpop.f32.mrb[0].mxu0
    %v1419 = vadd.f32 %v1306, %v1418
    %v1420 = vpop.f32.mrb[0].mxu0
    %v1421 = vadd.f32 %v1308, %v1420
    %v1422 = vpop.f32.mrb[0].mxu0
    %v1423 = vadd.f32 %v1310, %v1422
    %v1424 = vpop.f32.mrb[0].mxu0
    %v1425 = vadd.f32 %v1312, %v1424
    %1426 = vmatprep.mubr.bf16.mxu0 %v159
    %1427 = vmatmul.mubr.bf16.gmra.mrb[0].mxu0 %v135
    %v1428 = vpop.f32.mrb[0].mxu0
    %v1429 = vadd.f32 %v1316, %v1428
    %v1430 = vpop.f32.mrb[0].mxu0
    %v1431 = vadd.f32 %v1318, %v1430
    %v1432 = vpop.f32.mrb[0].mxu0
    %v1433 = vadd.f32 %v1320, %v1432
    %v1434 = vpop.f32.mrb[0].mxu0
    %v1435 = vadd.f32 %v1322, %v1434
    %1436 = vdwg.mxu0
    %1437 = vmatprep.subr.bf16.mxu0 %v907
    %1438 = vmatpush1.bf16.msra.mxu0 %v906
    %1439 = vmatprep.subr.bf16.mxu0 %v909
    %1440 = vmatpush1.bf16.msra.mxu0 %v908
    %1441 = vmatprep.subr.bf16.mxu0 %v911
    %1442 = vmatpush1.bf16.msra.mxu0 %v910
    %1443 = vmatprep.subr.bf16.mxu0 %v913
    %1444 = vmatpush1.bf16.msra.mxu0 %v912
    %1445 = vmatprep.subr.bf16.mxu0 %v915
    %1446 = vmatpush1.bf16.msra.mxu0 %v914
    %1447 = vmatprep.subr.bf16.mxu0 %v917
    %1448 = vmatpush1.bf16.msra.mxu0 %v916
    %1449 = vmatprep.subr.bf16.mxu0 %v919
    %1450 = vmatpush1.bf16.msra.mxu0 %v918
    %1451 = vmatprep.subr.bf16.mxu0 %v921
    %1452 = vmatpush1.bf16.msra.mxu0 %v920
    %1453 = vmatprep.subr.bf16.mxu0 %v923
    %1454 = vmatpush1.bf16.msra.mxu0 %v922
    %1455 = vmatprep.subr.bf16.mxu0 %v925
    %1456 = vmatpush1.bf16.msra.mxu0 %v924
    %1457 = vmatprep.subr.bf16.mxu0 %v927
    %1458 = vmatpush1.bf16.msra.mxu0 %v926
    %1459 = vmatprep.subr.bf16.mxu0 %v929
    %1460 = vmatpush1.bf16.msra.mxu0 %v928
    %1461 = vmatprep.subr.bf16.mxu0 %v931
    %1462 = vmatpush1.bf16.msra.mxu0 %v930
    %1463 = vmatprep.subr.bf16.mxu0 %v933
    %1464 = vmatpush1.bf16.msra.mxu0 %v932
    %1465 = vmatprep.subr.bf16.mxu0 %v935
    %1466 = vmatpush1.bf16.msra.mxu0 %v934
    %1467 = vmatprep.subr.bf16.mxu0 %v937
    %1468 = vmatpush1.bf16.msra.mxu0 %v936
    %1469 = vmatprep.mubr.bf16.mxu0 %v202
    %1470 = vmatmul.mubr.bf16.gmra.mrb[0].mxu0 %v177
    %v1471 = vpop.f32.mrb[0].mxu0
    %v1472 = vadd.f32 %v1359, %v1471
    %v1473 = vpop.f32.mrb[0].mxu0
    %v1474 = vadd.f32 %v1361, %v1473
    %v1475 = vpop.f32.mrb[0].mxu0
    %v1476 = vadd.f32 %v1363, %v1475
    %v1477 = vpop.f32.mrb[0].mxu0
    %v1478 = vadd.f32 %v1365, %v1477
    %1479 = vmatprep.mubr.bf16.mxu0 %v203
    %1480 = vmatmul.mubr.bf16.gmra.mrb[0].mxu0 %v178
    %v1481 = vpop.f32.mrb[0].mxu0
    %v1482 = vadd.f32 %v1369, %v1481
    %v1483 = vpop.f32.mrb[0].mxu0
    %v1484 = vadd.f32 %v1371, %v1483
    %v1485 = vpop.f32.mrb[0].mxu0
    %v1486 = vadd.f32 %v1373, %v1485
    %v1487 = vpop.f32.mrb[0].mxu0
    %v1488 = vadd.f32 %v1375, %v1487
    %1489 = vmatprep.mubr.bf16.mxu0 %v204
    %1490 = vmatmul.mubr.bf16.gmra.mrb[0].mxu0 %v179
    %v1491 = vpop.f32.mrb[0].mxu0
    %v1492 = vadd.f32 %v1379, %v1491
    %v1493 = vpop.f32.mrb[0].mxu0
    %v1494 = vadd.f32 %v1381, %v1493
    %v1495 = vpop.f32.mrb[0].mxu0
    %v1496 = vadd.f32 %v1383, %v1495
    %v1497 = vpop.f32.mrb[0].mxu0
    %v1498 = vadd.f32 %v1385, %v1497
    %1499 = vmatprep.mubr.bf16.mxu0 %v205
    %1500 = vmatmul.mubr.bf16.gmra.mrb[0].mxu0 %v180
    %v1501 = vpop.f32.mrb[0].mxu0
    %v1502 = vadd.f32 %v1389, %v1501
    %v1503 = vpop.f32.mrb[0].mxu0
    %v1504 = vadd.f32 %v1391, %v1503
    %v1505 = vpop.f32.mrb[0].mxu0
    %v1506 = vadd.f32 %v1393, %v1505
    %v1507 = vpop.f32.mrb[0].mxu0
    %v1508 = vadd.f32 %v1395, %v1507
    %1509 = vmatprep.mubr.bf16.mxu0 %v206
    %1510 = vmatmul.mubr.bf16.gmra.mrb[0].mxu0 %v181
    %v1511 = vpop.f32.mrb[0].mxu0
    %v1512 = vadd.f32 %v1399, %v1511
    %v1513 = vpop.f32.mrb[0].mxu0
    %v1514 = vadd.f32 %v1401, %v1513
    %v1515 = vpop.f32.mrb[0].mxu0
    %v1516 = vadd.f32 %v1403, %v1515
    %v1517 = vpop.f32.mrb[0].mxu0
    %v1518 = vadd.f32 %v1405, %v1517
    %1519 = vmatprep.mubr.bf16.mxu0 %v207
    %1520 = vmatmul.mubr.bf16.gmra.mrb[0].mxu0 %v182
    %v1521 = vpop.f32.mrb[0].mxu0
    %v1522 = vadd.f32 %v1409, %v1521
    %v1523 = vpop.f32.mrb[0].mxu0
    %v1524 = vadd.f32 %v1411, %v1523
    %v1525 = vpop.f32.mrb[0].mxu0
    %v1526 = vadd.f32 %v1413, %v1525
    %v1527 = vpop.f32.mrb[0].mxu0
    %v1528 = vadd.f32 %v1415, %v1527
    %1529 = vmatprep.mubr.bf16.mxu0 %v208
    %1530 = vmatmul.mubr.bf16.gmra.mrb[0].mxu0 %v183
    %v1531 = vpop.f32.mrb[0].mxu0
    %v1532 = vadd.f32 %v1419, %v1531
    %v1533 = vpop.f32.mrb[0].mxu0
    %v1534 = vadd.f32 %v1421, %v1533
    %v1535 = vpop.f32.mrb[0].mxu0
    %v1536 = vadd.f32 %v1423, %v1535
    %v1537 = vpop.f32.mrb[0].mxu0
    %v1538 = vadd.f32 %v1425, %v1537
    %1539 = vmatprep.mubr.bf16.mxu0 %v209
    %1540 = vmatmul.mubr.bf16.gmra.mrb[0].mxu0 %v184
    %v1541 = vpop.f32.mrb[0].mxu0
    %v1542 = vadd.f32 %v1429, %v1541
    %v1543 = vpop.f32.mrb[0].mxu0
    %v1544 = vadd.f32 %v1431, %v1543
    %v1545 = vpop.f32.mrb[0].mxu0
    %v1546 = vadd.f32 %v1433, %v1545
    %v1547 = vpop.f32.mrb[0].mxu0
    %v1548 = vadd.f32 %v1435, %v1547
    %1549 = vdwg.mxu0
    %1550 = vmatprep.subr.bf16.mxu0 %v939
    %1551 = vmatpush1.bf16.msra.mxu0 %v938
    %1552 = vmatprep.subr.bf16.mxu0 %v941
    %1553 = vmatpush1.bf16.msra.mxu0 %v940
    %1554 = vmatprep.subr.bf16.mxu0 %v943
    %1555 = vmatpush1.bf16.msra.mxu0 %v942
    %1556 = vmatprep.subr.bf16.mxu0 %v945
    %1557 = vmatpush1.bf16.msra.mxu0 %v944
    %1558 = vmatprep.subr.bf16.mxu0 %v947
    %1559 = vmatpush1.bf16.msra.mxu0 %v946
    %1560 = vmatprep.subr.bf16.mxu0 %v949
    %1561 = vmatpush1.bf16.msra.mxu0 %v948
    %1562 = vmatprep.subr.bf16.mxu0 %v951
    %1563 = vmatpush1.bf16.msra.mxu0 %v950
    %1564 = vmatprep.subr.bf16.mxu0 %v953
    %1565 = vmatpush1.bf16.msra.mxu0 %v952
    %1566 = vmatprep.subr.bf16.mxu0 0
    %1567 = vmatpush1.bf16.msra.mxu0 0
    %1568 = vmatprep.subr.bf16.mxu0 0
    %1569 = vmatpush1.bf16.msra.mxu0 0
    %1570 = vmatprep.subr.bf16.mxu0 0
    %1571 = vmatpush1.bf16.msra.mxu0 0
    %1572 = vmatprep.subr.bf16.mxu0 0
    %1573 = vmatpush1.bf16.msra.mxu0 0
    %1574 = vmatprep.subr.bf16.mxu0 0
    %1575 = vmatpush1.bf16.msra.mxu0 0
    %1576 = vmatprep.subr.bf16.mxu0 0
    %1577 = vmatpush1.bf16.msra.mxu0 0
    %1578 = vmatprep.subr.bf16.mxu0 0
    %1579 = vmatpush1.bf16.msra.mxu0 0
    %1580 = vmatprep.subr.bf16.mxu0 0
    %1581 = vmatpush1.bf16.msra.mxu0 0
    %1582 = vmatprep.mubr.bf16.mxu0 0
    %1583 = vmatmul.mubr.bf16.gmra.mrb[0].mxu0 %v226
    %v1584 = vpop.f32.mrb[0].mxu0
    %v1585 = vadd.f32 %v1472, %v1584
    %v1586 = vpop.f32.mrb[0].mxu0
    %v1587 = vadd.f32 %v1474, %v1586
    %v1588 = vpop.f32.mrb[0].mxu0
    %v1589 = vadd.f32 %v1476, %v1588
    %v1590 = vpop.f32.mrb[0].mxu0
    %v1591 = vadd.f32 %v1478, %v1590
    %1592 = vmatprep.mubr.bf16.mxu0 0
    %1593 = vmatmul.mubr.bf16.gmra.mrb[0].mxu0 %v227
    %v1594 = vpop.f32.mrb[0].mxu0
    %v1595 = vadd.f32 %v1482, %v1594
    %v1596 = vpop.f32.mrb[0].mxu0
    %v1597 = vadd.f32 %v1484, %v1596
    %v1598 = vpop.f32.mrb[0].mxu0
    %v1599 = vadd.f32 %v1486, %v1598
    %v1600 = vpop.f32.mrb[0].mxu0
    %v1601 = vadd.f32 %v1488, %v1600
    %1602 = vmatprep.mubr.bf16.mxu0 0
    %1603 = vmatmul.mubr.bf16.gmra.mrb[0].mxu0 %v228
    %v1604 = vpop.f32.mrb[0].mxu0
    %v1605 = vadd.f32 %v1492, %v1604
    %v1606 = vpop.f32.mrb[0].mxu0
    %v1607 = vadd.f32 %v1494, %v1606
    %v1608 = vpop.f32.mrb[0].mxu0
    %v1609 = vadd.f32 %v1496, %v1608
    %v1610 = vpop.f32.mrb[0].mxu0
    %v1611 = vadd.f32 %v1498, %v1610
    %1612 = vmatprep.mubr.bf16.mxu0 0
    %1613 = vmatmul.mubr.bf16.gmra.mrb[0].mxu0 %v229
    %v1614 = vpop.f32.mrb[0].mxu0
    %v1615 = vadd.f32 %v1502, %v1614
    %v1616 = vpop.f32.mrb[0].mxu0
    %v1617 = vadd.f32 %v1504, %v1616
    %v1618 = vpop.f32.mrb[0].mxu0
    %v1619 = vadd.f32 %v1506, %v1618
    %v1620 = vpop.f32.mrb[0].mxu0
    %v1621 = vadd.f32 %v1508, %v1620
    %1622 = vmatprep.mubr.bf16.mxu0 0
    %1623 = vmatmul.mubr.bf16.gmra.mrb[0].mxu0 %v230
    %v1624 = vpop.f32.mrb[0].mxu0
    %v1625 = vadd.f32 %v1512, %v1624
    %v1626 = vpop.f32.mrb[0].mxu0
    %v1627 = vadd.f32 %v1514, %v1626
    %v1628 = vpop.f32.mrb[0].mxu0
    %v1629 = vadd.f32 %v1516, %v1628
    %v1630 = vpop.f32.mrb[0].mxu0
    %v1631 = vadd.f32 %v1518, %v1630
    %1632 = vmatprep.mubr.bf16.mxu0 0
    %1633 = vmatmul.mubr.bf16.gmra.mrb[0].mxu0 %v231
    %v1634 = vpop.f32.mrb[0].mxu0
    %v1635 = vadd.f32 %v1522, %v1634
    %v1636 = vpop.f32.mrb[0].mxu0
    %v1637 = vadd.f32 %v1524, %v1636
    %v1638 = vpop.f32.mrb[0].mxu0
    %v1639 = vadd.f32 %v1526, %v1638
    %v1640 = vpop.f32.mrb[0].mxu0
    %v1641 = vadd.f32 %v1528, %v1640
    %1642 = vmatprep.mubr.bf16.mxu0 0
    %1643 = vmatmul.mubr.bf16.gmra.mrb[0].mxu0 %v232
    %v1644 = vpop.f32.mrb[0].mxu0
    %v1645 = vadd.f32 %v1532, %v1644
    %v1646 = vpop.f32.mrb[0].mxu0
    %v1647 = vadd.f32 %v1534, %v1646
    %v1648 = vpop.f32.mrb[0].mxu0
    %v1649 = vadd.f32 %v1536, %v1648
    %v1650 = vpop.f32.mrb[0].mxu0
    %v1651 = vadd.f32 %v1538, %v1650
    %1652 = vmatprep.mubr.bf16.mxu0 0
    %1653 = vmatmul.mubr.bf16.gmra.mrb[0].mxu0 %v233
    %v1654 = vpop.f32.mrb[0].mxu0
    %v1655 = vadd.f32 %v1542, %v1654
    %v1656 = vpop.f32.mrb[0].mxu0
    %v1657 = vadd.f32 %v1544, %v1656
    %v1658 = vpop.f32.mrb[0].mxu0
    %v1659 = vadd.f32 %v1546, %v1658
    %v1660 = vpop.f32.mrb[0].mxu0
    %v1661 = vadd.f32 %v1548, %v1660
    %1662 = vdwg.mxu0
    %1663 = vst [vmem:[#allocation2] sm:$0xff] %v1585
    %1664 = vst [vmem:[#allocation2 + $0x8] sm:$0xff] %v1587
    %1665 = vst [vmem:[#allocation2 + $0x10] sm:$0xff] %v1589
    %1666 = vst [vmem:[#allocation2 + $0x18] sm:$0xff] %v1591
    %1667 = vst [vmem:[#allocation2 + $0x20] sm:$0xff] %v1595
    %1668 = vst [vmem:[#allocation2 + $0x28] sm:$0xff] %v1597
    %1669 = vst [vmem:[#allocation2 + $0x30] sm:$0xff] %v1599
    %1670 = vst [vmem:[#allocation2 + $0x38] sm:$0xff] %v1601
    %1671 = vst [vmem:[#allocation2 + $0x40] sm:$0xff] %v1605
    %1672 = vst [vmem:[#allocation2 + $0x48] sm:$0xff] %v1607
    %1673 = vst [vmem:[#allocation2 + $0x50] sm:$0xff] %v1609
    %1674 = vst [vmem:[#allocation2 + $0x58] sm:$0xff] %v1611
    %1675 = vst [vmem:[#allocation2 + $0x60] sm:$0xff] %v1615
    %1676 = vst [vmem:[#allocation2 + $0x68] sm:$0xff] %v1617
    %1677 = vst [vmem:[#allocation2 + $0x70] sm:$0xff] %v1619
    %1678 = vst [vmem:[#allocation2 + $0x78] sm:$0xff] %v1621
    %1679 = vst [vmem:[#allocation2 + $0x80] sm:$0xff] %v1625
    %1680 = vst [vmem:[#allocation2 + $0x88] sm:$0xff] %v1627
    %1681 = vst [vmem:[#allocation2 + $0x90] sm:$0xff] %v1629
    %1682 = vst [vmem:[#allocation2 + $0x98] sm:$0xff] %v1631
    %1683 = vst [vmem:[#allocation2 + $0xa0] sm:$0xff] %v1635
    %1684 = vst [vmem:[#allocation2 + $0xa8] sm:$0xff] %v1637
    %1685 = vst [vmem:[#allocation2 + $0xb0] sm:$0xff] %v1639
    %1686 = vst [vmem:[#allocation2 + $0xb8] sm:$0xff] %v1641
    %1687 = vst [vmem:[#allocation2 + $0xc0] sm:$0xff] %v1645
    %1688 = vst [vmem:[#allocation2 + $0xc8] sm:$0xff] %v1647
    %1689 = vst [vmem:[#allocation2 + $0xd0] sm:$0xff] %v1649
    %1690 = vst [vmem:[#allocation2 + $0xd8] sm:$0xff] %v1651
    %1691 = vst [vmem:[#allocation2 + $0xe0] sm:$0xff] %v1655
    %1692 = vst [vmem:[#allocation2 + $0xe8] sm:$0xff] %v1657
    %1693 = vst [vmem:[#allocation2 + $0xf0] sm:$0xff] %v1659
    %1694 = vst [vmem:[#allocation2 + $0xf8] sm:$0xff] %v1661
    // Predicated region
    $region10: #{tpu_custom_call.1} parent=1 // pred_check
      _
    $region11: #{tpu_custom_call.1} parent=1 // pred_check_branch
      %1696 = sbr.rel (0) target = $region13
    $region12: #{tpu_custom_call.1} parent=1 // pred_region
      %s1698 = ssub.s32 4096, 4096
      %1699 = vsyncadd [#allocation3], %s1698
      %s1700 = sshll.u32 [#allocation2], 4
      %s1701 = int_to_ptr.vmem [resolvable:$true] %s1700
      %1706 = dma.vmem_to_hbm [thread:$0]  %s1701, 4096, %s2, [#allocation3], 256, 256, 16
    $region13: #{tpu_custom_call.1} parent=1 // pred_fallthru
      _
    // Predicated region
    $region14: #{tpu_custom_call.1} parent=1 // pred_check
      _
    $region15: #{tpu_custom_call.1} parent=1 // pred_check_branch
      %1708 = sbr.rel (0) target = $region17
    $region16: #{tpu_custom_call.1} parent=1 // pred_region
      %1709 = dma.done [#allocation3], 4096
    $region17: #{tpu_custom_call.1} parent=1 // pred_fallthru
      _
    %1710 = vsyncpa [#allocation3], 1

</llo_original>
